<compile_context>
chip_gen: v5e
topology: v5e:2x2
jax: 0.10.0
libtpu: 0.0.40
codegen_flags: <defaults>
</compile_context>

<pallas_src>
import functools

import jax
import jax.numpy as jnp
from jax import lax
from jax.experimental import pallas as pl
from jax.experimental.pallas import tpu as pltpu

EPS = 1e-5


def _round_up(x, m):
    return ((x + m - 1) // m) * m


# ------------------------------ Pallas kernel ------------------------------ #

def _basic_block_kernel(*refs, s, PW2, nbL2, OFF, stage_len, planes, downsample):
    np_in = s * s
    x_refs = refs[:np_in]
    mask_ref, w1_ref, b1_ref, w2_ref, b2_ref = refs[np_in:np_in + 5]
    pos = np_in + 5
    if downsample:
        wsc_ref, bsc_ref = refs[pos:pos + 2]
        pos += 2
    o_ref = refs[pos]
    stage_ref = refs[pos + 1]

    f32 = jnp.float32
    PW21 = PW2 + 1

    # ---- conv1 (3x3, stride s) + folded bn1 + relu: 9 tap matmuls --------- #
    # Each tap reads a contiguous lane slice of its parity plane; the output
    # (and every other per-image grid in this kernel) lives on the same
    # flattened (Ho+2, Wo+2) padded grid, which is what makes the slices
    # contiguous across the merged batch.
    acc1 = None
    for kh in range(3):
        for kw in range(3):
            p = (kh % s) * s + (kw % s)
            d = (kh // s) * PW2 + (kw // s)
            rhs = x_refs[p][:, d:d + nbL2]                       # (cin, nbL2) bf16
            t = jnp.dot(w1_ref[kh * 3 + kw], rhs, preferred_element_type=f32)
            acc1 = t if acc1 is None else acc1 + t
    # Mask zeroes the per-row/row-block padding positions so they act as
    # conv2's zero padding when re-read through shifted slices.
    out1 = jnp.maximum(acc1 + b1_ref[...], 0.0) * mask_ref[...]  # (planes, nbL2)

    # ---- stage conv1's output (bf16) with halo-only zeroing --------------- #
    stage_ref[:, :OFF] = jnp.zeros((planes, OFF), jnp.bfloat16)
    stage_ref[:, OFF + nbL2:] = jnp.zeros(
        (planes, stage_len - OFF - nbL2), jnp.bfloat16)
    stage_ref[:, OFF:OFF + nbL2] = out1.astype(jnp.bfloat16)     # lane-aligned

    # ---- conv2 (3x3, stride 1) + folded bn2 -------------------------------- #
    acc2 = None
    for kh in range(3):
        for kw in range(3):
            start = OFF - PW21 + kh * PW2 + kw
            rhs = stage_ref[:, start:start + nbL2]               # (planes, nbL2) bf16
            t = jnp.dot(w2_ref[kh * 3 + kw], rhs, preferred_element_type=f32)
            acc2 = t if acc2 is None else acc2 + t
    acc2 = acc2 + b2_ref[...]

    # ---- shortcut (read straight from the input planes) -------------------- #
    if downsample:
        if s == 1:
            xs = x_refs[0][:, PW21:PW21 + nbL2]
        else:
            xs = x_refs[s * s - 1][:, 0:nbL2]                    # parity (1,1)
        sc = jnp.dot(wsc_ref[...], xs, preferred_element_type=f32) + bsc_ref[...]
    else:
        sc = x_refs[0][:, PW21:PW21 + nbL2].astype(f32)          # identity

    o_ref[...] = jnp.maximum(acc2 + sc, 0.0)                     # (planes, nbL2) f32


# ------------------------------ JAX wrapper -------------------------------- #

def _fold_bn(gamma, beta, mean, var):
    scale = gamma / jnp.sqrt(var + EPS)
    return scale, beta - mean * scale


def _conv_taps(w_oihw, scale):
    """(O, I, 3, 3) -> (9, O, I) bf16 with the BN scale folded into O."""
    O, I = w_oihw.shape[0], w_oihw.shape[1]
    w = jnp.transpose(w_oihw, (2, 3, 0, 1)).reshape(9, O, I)
    return (w * scale[None, :, None]).astype(jnp.bfloat16)


def basic_block_forward(x_nchw, params, stride, in_planes, planes):
    N, Cin, H, W = x_nchw.shape
    assert Cin == in_planes
    s = int(stride)
    assert H % s == 0 and W % s == 0
    Ho = (H + 2 - 3) // s + 1
    Wo = (W + 2 - 3) // s + 1
    PH2, PW2 = Ho + 2, Wo + 2            # unified per-image padded grid
    L2 = PH2 * PW2
    downsample = (s != 1) or (in_planes != planes)

    tail = 2 * PW2 + 2                   # max tap offset (stride-1 case)
    OFF = _round_up(PW2 + 1, 128)        # lane-aligned staging offset

    # ---- choose images-per-step nb (big lanes, VMEM-budgeted, >=2 steps) --- #
    def step_bytes(nb):
        nbL2 = nb * L2
        CL = _round_up(nbL2 + tail, 128)
        stage_len = _round_up(OFF + nbL2 + PW2 + 1, 128)
        b = s * s * Cin * CL * 2 * 2               # input planes (bf16, 2x buf)
        b += planes * nbL2 * 4 * 2                 # output (f32, 2x buf)
        b += planes * stage_len * 2                # bf16 staging scratch
        b += nbL2 * 4 * 2                          # mask
        b += 6 * planes * nbL2 * 4                 # live f32 intermediates
        b += (9 * planes * Cin + 9 * planes * planes + planes * Cin) * 2 * 2
        return b

    budget = 20 * 1024 * 1024
    nb_cap = max(1, 8192 // L2)
    if N >= 2:
        nb_cap = min(nb_cap, max(1, N // 2))       # keep >=2 steps for megacore
    nb = 1
    for d in range(1, N + 1):
        if N % d == 0 and d <= nb_cap and step_bytes(d) <= budget:
            nb = d
    G = N // nb
    nbL2 = nb * L2
    CL = _round_up(nbL2 + tail, 128)
    stage_len = _round_up(OFF + nbL2 + PW2 + 1, 128)

    # ---- activation layout glue (wrapper-side, XLA) ------------------------ #
    x_pad = jnp.pad(x_nchw, ((0, 0), (0, 0), (1, 1), (1, 1)))
    if s == 1:
        plane_imgs = [x_pad]                                  # (N, Cin, PH2, PW2)
    else:
        plane_imgs = []
        for a in range(s):
            for bb in range(s):
                pp = x_pad[:, :, a::s, bb::s]
                pp = jnp.pad(pp, ((0, 0), (0, 0),
                                  (0, PH2 - pp.shape[2]),
                                  (0, PW2 - pp.shape[3])))
                plane_imgs.append(pp)

    def to_chunks(img):   # (N, Cin, PH2, PW2) -> (G, Cin, CL) bf16
        a = img.reshape(G, nb, Cin, L2)
        a = jnp.transpose(a, (0, 2, 1, 3)).reshape(G, Cin, nbL2)
        a = jnp.pad(a, ((0, 0), (0, 0), (0, CL - nbL2)))
        return a.astype(jnp.bfloat16)

    plane_chunks = [to_chunks(p) for p in plane_imgs]

    # Per-image validity mask on the padded grid (1 at y<Ho and x<Wo).
    row_valid = jnp.arange(PH2) < Ho
    col_valid = jnp.arange(PW2) < Wo
    m = (row_valid[:, None] & col_valid[None, :]).astype(jnp.float32).reshape(-1)
    mask = jnp.tile(m, (nb,)).reshape(1, nbL2)

    # ---- fold eval-mode BN into the conv weights --------------------------- #
    scale1, bias1 = _fold_bn(*params["bn1"])
    scale2, bias2 = _fold_bn(*params["bn2"])
    w1 = _conv_taps(params["w1"], scale1)                    # (9, planes, Cin)
    w2 = _conv_taps(params["w2"], scale2)                    # (9, planes, planes)
    b1 = bias1.reshape(planes, 1).astype(jnp.float32)
    b2 = bias2.reshape(planes, 1).astype(jnp.float32)

    inputs = plane_chunks + [mask, w1, b1, w2, b2]
    if downsample:
        scale_sc, bias_sc = _fold_bn(*params["bn_sc"])
        wsc = (params["w_sc"].reshape(planes, Cin)
               * scale_sc[:, None]).astype(jnp.bfloat16)
        bsc = bias_sc.reshape(planes, 1).astype(jnp.float32)
        inputs += [wsc, bsc]

    in_specs = [pl.BlockSpec((None, Cin, CL), lambda n: (n, 0, 0))
                for _ in plane_chunks]
    in_specs.append(pl.BlockSpec((1, nbL2), lambda n: (0, 0)))              # mask
    in_specs.append(pl.BlockSpec((9, planes, Cin), lambda n: (0, 0, 0)))    # w1
    in_specs.append(pl.BlockSpec((planes, 1), lambda n: (0, 0)))            # b1
    in_specs.append(pl.BlockSpec((9, planes, planes), lambda n: (0, 0, 0)))  # w2
    in_specs.append(pl.BlockSpec((planes, 1), lambda n: (0, 0)))            # b2
    if downsample:
        in_specs.append(pl.BlockSpec((planes, Cin), lambda n: (0, 0)))      # wsc
        in_specs.append(pl.BlockSpec((planes, 1), lambda n: (0, 0)))        # bsc

    out_specs = pl.BlockSpec((None, planes, nbL2), lambda n: (n, 0, 0))

    kernel = functools.partial(
        _basic_block_kernel, s=s, PW2=PW2, nbL2=nbL2, OFF=OFF,
        stage_len=stage_len, planes=planes, downsample=downsample)

    flops = 2 * N * L2 * (9 * Cin * planes + 9 * planes * planes
                          + (Cin * planes if downsample else 0))
    bytes_accessed = (sum(int(a.size) * a.dtype.itemsize for a in inputs)
                      + N * L2 * planes * 4)
    est = step_bytes(nb)

    out = pl.pallas_call(
        kernel,
        out_shape=jax.ShapeDtypeStruct((G, planes, nbL2), jnp.float32),
        grid_spec=pltpu.PrefetchScalarGridSpec(
            num_scalar_prefetch=0,
            grid=(G,),
            in_specs=in_specs,
            out_specs=out_specs,
            scratch_shapes=[pltpu.VMEM((planes, stage_len), jnp.bfloat16)],
        ),
        compiler_params=pltpu.CompilerParams(
            dimension_semantics=("parallel",),
            vmem_limit_bytes=int(max(32 * 2 ** 20, min(2 * est, 100 * 2 ** 20))),
        ),
        cost_estimate=pl.CostEstimate(
            flops=int(flops), transcendentals=0,
            bytes_accessed=int(bytes_accessed)),
    )(*inputs)

    # Lane-dense slab -> NCHW (layout glue in XLA, outside the kernel).
    out = out.reshape(G, planes, nb, PH2, PW2)
    out = jnp.transpose(out, (0, 2, 1, 3, 4)).reshape(N, planes, PH2, PW2)
    return out[:, :, :Ho, :Wo]


# ---------------------------- pure-JAX reference ---------------------------- #

def _conv_nchw(x, w, stride, pad):
    return lax.conv_general_dilated(
        x, w, (stride, stride), [(pad, pad), (pad, pad)],
        dimension_numbers=("NCHW", "OIHW", "NCHW"))


def _bn_nchw(y, gamma, beta, mean, var):
    scale = (gamma / jnp.sqrt(var + EPS))[None, :, None, None]
    return (y - mean[None, :, None, None]) * scale + beta[None, :, None, None]


def reference_forward(x, params, stride, in_planes, planes):
    out = jax.nn.relu(_bn_nchw(_conv_nchw(x, params["w1"], stride, 1), *params["bn1"]))
    out = _bn_nchw(_conv_nchw(out, params["w2"], 1, 1), *params["bn2"])
    if stride != 1 or in_planes != planes:
        sc = _bn_nchw(_conv_nchw(x, params["w_sc"], stride, 0), *params["bn_sc"])
    else:
        sc = x
    return jax.nn.relu(out + sc)


# ---------------------------------- main ------------------------------------ #

def make_params(key, in_planes, planes, stride):
    ks = jax.random.split(key, 8)

    def bn_params(k):
        k1, k2, k3, k4 = jax.random.split(k, 4)
        gamma = jax.random.uniform(k1, (planes,), jnp.float32, 0.5, 1.5)
        beta = 0.1 * jax.random.normal(k2, (planes,), jnp.float32)
        mean = 0.1 * jax.random.normal(k3, (planes,), jnp.float32)
        var = jax.random.uniform(k4, (planes,), jnp.float32, 0.5, 1.5)
        return (gamma, beta, mean, var)

    params = {
        "w1": 0.1 * jax.random.normal(ks[0], (planes, in_planes, 3, 3), jnp.float32),
        "w2": 0.1 * jax.random.normal(ks[1], (planes, planes, 3, 3), jnp.float32),
        "bn1": bn_params(ks[2]),
        "bn2": bn_params(ks[3]),
    }
    if stride != 1 or in_planes != planes:
        params["w_sc"] = 0.1 * jax.random.normal(
            ks[4], (planes, in_planes, 1, 1), jnp.float32)
        params["bn_sc"] = bn_params(ks[5])
    return params


if __name__ == "__main__":
    key = jax.random.PRNGKey(0)
    cases = [
        # (in_planes, planes, stride, N, H, W)
        (4, 8, 2, 2, 16, 16),   # downsampling block (1x1 conv + BN shortcut)
        (8, 8, 1, 2, 16, 16),   # identity-shortcut block
    ]
    for in_planes, planes, stride, N, H, W in cases:
        key, kx, kp = jax.random.split(key, 3)
        x = jax.random.normal(kx, (N, in_planes, H, W), jnp.float32)
        params = make_params(kp, in_planes, planes, stride)

        out = jax.block_until_ready(
            basic_block_forward(x, params, stride, in_planes, planes))
        ref = reference_forward(x, params, stride, in_planes, planes)

        assert out.shape == ref.shape, (out.shape, ref.shape)
        max_err = float(jnp.max(jnp.abs(out - ref)))
        # bf16 inputs/weights with f32 accumulation -> small tolerance needed.
        assert jnp.allclose(out, ref, rtol=5e-2, atol=5e-2), max_err

    print("KERNEL_OK")
</pallas_src>

<mosaic_0001>
module attributes {stable_mosaic.version = 11 : i64} {
  func.func @_basic_block_kernel(%arg0: i32, %arg1: memref<1x4x128xbf16, #tpu.memory_space<vmem>>, %arg2: memref<1x4x128xbf16, #tpu.memory_space<vmem>>, %arg3: memref<1x4x128xbf16, #tpu.memory_space<vmem>>, %arg4: memref<1x4x128xbf16, #tpu.memory_space<vmem>>, %arg5: memref<1x100xf32, #tpu.memory_space<vmem>>, %arg6: memref<9x8x4xbf16, #tpu.memory_space<vmem>>, %arg7: memref<8x1xf32, #tpu.memory_space<vmem>>, %arg8: memref<9x8x8xbf16, #tpu.memory_space<vmem>>, %arg9: memref<8x1xf32, #tpu.memory_space<vmem>>, %arg10: memref<8x4xbf16, #tpu.memory_space<vmem>>, %arg11: memref<8x1xf32, #tpu.memory_space<vmem>>, %arg12: memref<1x8x100xf32, #tpu.memory_space<vmem>>, %arg13: memref<8x256xbf16, #tpu.memory_space<vmem>>) attributes {dimension_semantics = [#tpu.dimension_semantics<parallel>], iteration_bounds = array<i64: 2>, scalar_prefetch = 0 : i64, scratch_operands = 1 : i64, tpu.core_type = #tpu.core_type<tc>, window_params = [{transform_indices = @transform_0, window_bounds = array<i64: 1, 4, 128>}, {transform_indices = @transform_1, window_bounds = array<i64: 1, 4, 128>}, {transform_indices = @transform_2, window_bounds = array<i64: 1, 4, 128>}, {transform_indices = @transform_3, window_bounds = array<i64: 1, 4, 128>}, {pipeline_mode = #tpu.pipeline_mode<synchronous>, transform_indices = @transform_4, window_bounds = array<i64: 1, 100>}, {pipeline_mode = #tpu.pipeline_mode<synchronous>, transform_indices = @transform_5, window_bounds = array<i64: 9, 8, 4>}, {pipeline_mode = #tpu.pipeline_mode<synchronous>, transform_indices = @transform_6, window_bounds = array<i64: 8, 1>}, {pipeline_mode = #tpu.pipeline_mode<synchronous>, transform_indices = @transform_7, window_bounds = array<i64: 9, 8, 8>}, {pipeline_mode = #tpu.pipeline_mode<synchronous>, transform_indices = @transform_8, window_bounds = array<i64: 8, 1>}, {pipeline_mode = #tpu.pipeline_mode<synchronous>, transform_indices = @transform_9, window_bounds = array<i64: 8, 4>}, {pipeline_mode = #tpu.pipeline_mode<synchronous>, transform_indices = @transform_10, window_bounds = array<i64: 8, 1>}, {transform_indices = @transform_11, window_bounds = array<i64: 1, 8, 100>}]} {
    %c0 = arith.constant 0 : index
    %c0_0 = arith.constant 0 : index
    %c0_1 = arith.constant 0 : index
    %0 = vector.load %arg1[%c0, %c0_0, %c0_1] : memref<1x4x128xbf16, #tpu.memory_space<vmem>>, vector<1x4x100xbf16>
    %1 = vector.shape_cast %0 : vector<1x4x100xbf16> to vector<4x100xbf16>
    %c0_2 = arith.constant 0 : index
    %c0_3 = arith.constant 0 : index
    %c0_4 = arith.constant 0 : index
    %2 = vector.load %arg6[%c0_2, %c0_3, %c0_4] : memref<9x8x4xbf16, #tpu.memory_space<vmem>>, vector<1x8x4xbf16>
    %3 = vector.shape_cast %2 : vector<1x8x4xbf16> to vector<8x4xbf16>
    %cst = arith.constant dense<0.000000e+00> : vector<8x100xf32>
    %4 = tpu.matmul %3, %1, %cst {dimension_numbers = #tpu.dot_dimension_numbers<[1], [0], [0], [1], [0, 0, 1, 1], [], []>} : vector<8x4xbf16>, vector<4x100xbf16>, vector<8x100xf32> -> vector<8x100xf32>
    %c0_5 = arith.constant 0 : index
    %c0_6 = arith.constant 0 : index
    %c0_7 = arith.constant 0 : index
    %5 = vector.load %arg2[%c0_5, %c0_6, %c0_7] : memref<1x4x128xbf16, #tpu.memory_space<vmem>>, vector<1x4x100xbf16>
    %6 = vector.shape_cast %5 : vector<1x4x100xbf16> to vector<4x100xbf16>
    %c1 = arith.constant 1 : index
    %c0_8 = arith.constant 0 : index
    %c0_9 = arith.constant 0 : index
    %7 = vector.load %arg6[%c1, %c0_8, %c0_9] : memref<9x8x4xbf16, #tpu.memory_space<vmem>>, vector<1x8x4xbf16>
    %8 = vector.shape_cast %7 : vector<1x8x4xbf16> to vector<8x4xbf16>
    %cst_10 = arith.constant dense<0.000000e+00> : vector<8x100xf32>
    %9 = tpu.matmul %8, %6, %cst_10 {dimension_numbers = #tpu.dot_dimension_numbers<[1], [0], [0], [1], [0, 0, 1, 1], [], []>} : vector<8x4xbf16>, vector<4x100xbf16>, vector<8x100xf32> -> vector<8x100xf32>
    %10 = arith.addf %4, %9 : vector<8x100xf32>
    %c0_11 = arith.constant 0 : index
    %c0_12 = arith.constant 0 : index
    %c1_13 = arith.constant 1 : index
    %11 = vector.load %arg1[%c0_11, %c0_12, %c1_13] : memref<1x4x128xbf16, #tpu.memory_space<vmem>>, vector<1x4x100xbf16>
    %12 = vector.shape_cast %11 : vector<1x4x100xbf16> to vector<4x100xbf16>
    %c2 = arith.constant 2 : index
    %c0_14 = arith.constant 0 : index
    %c0_15 = arith.constant 0 : index
    %13 = vector.load %arg6[%c2, %c0_14, %c0_15] : memref<9x8x4xbf16, #tpu.memory_space<vmem>>, vector<1x8x4xbf16>
    %14 = vector.shape_cast %13 : vector<1x8x4xbf16> to vector<8x4xbf16>
    %cst_16 = arith.constant dense<0.000000e+00> : vector<8x100xf32>
    %15 = tpu.matmul %14, %12, %cst_16 {dimension_numbers = #tpu.dot_dimension_numbers<[1], [0], [0], [1], [0, 0, 1, 1], [], []>} : vector<8x4xbf16>, vector<4x100xbf16>, vector<8x100xf32> -> vector<8x100xf32>
    %16 = arith.addf %10, %15 : vector<8x100xf32>
    %c0_17 = arith.constant 0 : index
    %c0_18 = arith.constant 0 : index
    %c0_19 = arith.constant 0 : index
    %17 = vector.load %arg3[%c0_17, %c0_18, %c0_19] : memref<1x4x128xbf16, #tpu.memory_space<vmem>>, vector<1x4x100xbf16>
    %18 = vector.shape_cast %17 : vector<1x4x100xbf16> to vector<4x100xbf16>
    %c3 = arith.constant 3 : index
    %c0_20 = arith.constant 0 : index
    %c0_21 = arith.constant 0 : index
    %19 = vector.load %arg6[%c3, %c0_20, %c0_21] : memref<9x8x4xbf16, #tpu.memory_space<vmem>>, vector<1x8x4xbf16>
    %20 = vector.shape_cast %19 : vector<1x8x4xbf16> to vector<8x4xbf16>
    %cst_22 = arith.constant dense<0.000000e+00> : vector<8x100xf32>
    %21 = tpu.matmul %20, %18, %cst_22 {dimension_numbers = #tpu.dot_dimension_numbers<[1], [0], [0], [1], [0, 0, 1, 1], [], []>} : vector<8x4xbf16>, vector<4x100xbf16>, vector<8x100xf32> -> vector<8x100xf32>
    %22 = arith.addf %16, %21 : vector<8x100xf32>
    %c0_23 = arith.constant 0 : index
    %c0_24 = arith.constant 0 : index
    %c0_25 = arith.constant 0 : index
    %23 = vector.load %arg4[%c0_23, %c0_24, %c0_25] : memref<1x4x128xbf16, #tpu.memory_space<vmem>>, vector<1x4x100xbf16>
    %24 = vector.shape_cast %23 : vector<1x4x100xbf16> to vector<4x100xbf16>
    %c4 = arith.constant 4 : index
    %c0_26 = arith.constant 0 : index
    %c0_27 = arith.constant 0 : index
    %25 = vector.load %arg6[%c4, %c0_26, %c0_27] : memref<9x8x4xbf16, #tpu.memory_space<vmem>>, vector<1x8x4xbf16>
    %26 = vector.shape_cast %25 : vector<1x8x4xbf16> to vector<8x4xbf16>
    %cst_28 = arith.constant dense<0.000000e+00> : vector<8x100xf32>
    %27 = tpu.matmul %26, %24, %cst_28 {dimension_numbers = #tpu.dot_dimension_numbers<[1], [0], [0], [1], [0, 0, 1, 1], [], []>} : vector<8x4xbf16>, vector<4x100xbf16>, vector<8x100xf32> -> vector<8x100xf32>
    %28 = arith.addf %22, %27 : vector<8x100xf32>
    %c0_29 = arith.constant 0 : index
    %c0_30 = arith.constant 0 : index
    %c1_31 = arith.constant 1 : index
    %29 = vector.load %arg3[%c0_29, %c0_30, %c1_31] : memref<1x4x128xbf16, #tpu.memory_space<vmem>>, vector<1x4x100xbf16>
    %30 = vector.shape_cast %29 : vector<1x4x100xbf16> to vector<4x100xbf16>
    %c5 = arith.constant 5 : index
    %c0_32 = arith.constant 0 : index
    %c0_33 = arith.constant 0 : index
    %31 = vector.load %arg6[%c5, %c0_32, %c0_33] : memref<9x8x4xbf16, #tpu.memory_space<vmem>>, vector<1x8x4xbf16>
    %32 = vector.shape_cast %31 : vector<1x8x4xbf16> to vector<8x4xbf16>
    %cst_34 = arith.constant dense<0.000000e+00> : vector<8x100xf32>
    %33 = tpu.matmul %32, %30, %cst_34 {dimension_numbers = #tpu.dot_dimension_numbers<[1], [0], [0], [1], [0, 0, 1, 1], [], []>} : vector<8x4xbf16>, vector<4x100xbf16>, vector<8x100xf32> -> vector<8x100xf32>
    %34 = arith.addf %28, %33 : vector<8x100xf32>
    %c0_35 = arith.constant 0 : index
    %c0_36 = arith.constant 0 : index
    %c10 = arith.constant 10 : index
    %35 = vector.load %arg1[%c0_35, %c0_36, %c10] : memref<1x4x128xbf16, #tpu.memory_space<vmem>>, vector<1x4x100xbf16>
    %36 = vector.shape_cast %35 : vector<1x4x100xbf16> to vector<4x100xbf16>
    %c6 = arith.constant 6 : index
    %c0_37 = arith.constant 0 : index
    %c0_38 = arith.constant 0 : index
    %37 = vector.load %arg6[%c6, %c0_37, %c0_38] : memref<9x8x4xbf16, #tpu.memory_space<vmem>>, vector<1x8x4xbf16>
    %38 = vector.shape_cast %37 : vector<1x8x4xbf16> to vector<8x4xbf16>
    %cst_39 = arith.constant dense<0.000000e+00> : vector<8x100xf32>
    %39 = tpu.matmul %38, %36, %cst_39 {dimension_numbers = #tpu.dot_dimension_numbers<[1], [0], [0], [1], [0, 0, 1, 1], [], []>} : vector<8x4xbf16>, vector<4x100xbf16>, vector<8x100xf32> -> vector<8x100xf32>
    %40 = arith.addf %34, %39 : vector<8x100xf32>
    %c0_40 = arith.constant 0 : index
    %c0_41 = arith.constant 0 : index
    %c10_42 = arith.constant 10 : index
    %41 = vector.load %arg2[%c0_40, %c0_41, %c10_42] : memref<1x4x128xbf16, #tpu.memory_space<vmem>>, vector<1x4x100xbf16>
    %42 = vector.shape_cast %41 : vector<1x4x100xbf16> to vector<4x100xbf16>
    %c7 = arith.constant 7 : index
    %c0_43 = arith.constant 0 : index
    %c0_44 = arith.constant 0 : index
    %43 = vector.load %arg6[%c7, %c0_43, %c0_44] : memref<9x8x4xbf16, #tpu.memory_space<vmem>>, vector<1x8x4xbf16>
    %44 = vector.shape_cast %43 : vector<1x8x4xbf16> to vector<8x4xbf16>
    %cst_45 = arith.constant dense<0.000000e+00> : vector<8x100xf32>
    %45 = tpu.matmul %44, %42, %cst_45 {dimension_numbers = #tpu.dot_dimension_numbers<[1], [0], [0], [1], [0, 0, 1, 1], [], []>} : vector<8x4xbf16>, vector<4x100xbf16>, vector<8x100xf32> -> vector<8x100xf32>
    %46 = arith.addf %40, %45 : vector<8x100xf32>
    %c0_46 = arith.constant 0 : index
    %c0_47 = arith.constant 0 : index
    %c11 = arith.constant 11 : index
    %47 = vector.load %arg1[%c0_46, %c0_47, %c11] : memref<1x4x128xbf16, #tpu.memory_space<vmem>>, vector<1x4x100xbf16>
    %48 = vector.shape_cast %47 : vector<1x4x100xbf16> to vector<4x100xbf16>
    %c8 = arith.constant 8 : index
    %c0_48 = arith.constant 0 : index
    %c0_49 = arith.constant 0 : index
    %49 = vector.load %arg6[%c8, %c0_48, %c0_49] : memref<9x8x4xbf16, #tpu.memory_space<vmem>>, vector<1x8x4xbf16>
    %50 = vector.shape_cast %49 : vector<1x8x4xbf16> to vector<8x4xbf16>
    %cst_50 = arith.constant dense<0.000000e+00> : vector<8x100xf32>
    %51 = tpu.matmul %50, %48, %cst_50 {dimension_numbers = #tpu.dot_dimension_numbers<[1], [0], [0], [1], [0, 0, 1, 1], [], []>} : vector<8x4xbf16>, vector<4x100xbf16>, vector<8x100xf32> -> vector<8x100xf32>
    %52 = arith.addf %46, %51 : vector<8x100xf32>
    %c0_51 = arith.constant 0 : index
    %c0_52 = arith.constant 0 : index
    %53 = vector.load %arg7[%c0_51, %c0_52] : memref<8x1xf32, #tpu.memory_space<vmem>>, vector<8x1xf32>
    %54 = vector.broadcast %53 : vector<8x1xf32> to vector<8x100xf32>
    %55 = arith.addf %52, %54 : vector<8x100xf32>
    %cst_53 = arith.constant 0.000000e+00 : f32
    %56 = vector.broadcast %cst_53 : f32 to vector<8x100xf32>
    %57 = arith.maximumf %55, %56 : vector<8x100xf32>
    %c0_54 = arith.constant 0 : index
    %c0_55 = arith.constant 0 : index
    %58 = vector.load %arg5[%c0_54, %c0_55] : memref<1x100xf32, #tpu.memory_space<vmem>>, vector<1x100xf32>
    %59 = vector.broadcast %58 : vector<1x100xf32> to vector<8x100xf32>
    %60 = arith.mulf %57, %59 : vector<8x100xf32>
    %cst_56 = arith.constant 0.000000e+00 : bf16
    %61 = vector.broadcast %cst_56 : bf16 to vector<8x128xbf16>
    %c0_57 = arith.constant 0 : index
    %c0_58 = arith.constant 0 : index
    %62 = vector.load %arg13[%c0_57, %c0_58] : memref<8x256xbf16, #tpu.memory_space<vmem>>, vector<8x128xbf16>
    tpu.vector_store %arg13[%c0_57, %c0_58], %61 {strides = array<i32>} : memref<8x256xbf16, #tpu.memory_space<vmem>>, vector<8x128xbf16>,
    %cst_59 = arith.constant 0.000000e+00 : bf16
    %63 = vector.broadcast %cst_59 : bf16 to vector<8x28xbf16>
    %c0_60 = arith.constant 0 : index
    %c228 = arith.constant 228 : index
    %64 = vector.load %arg13[%c0_60, %c228] : memref<8x256xbf16, #tpu.memory_space<vmem>>, vector<8x28xbf16>
    tpu.vector_store %arg13[%c0_60, %c228], %63 {strides = array<i32>} : memref<8x256xbf16, #tpu.memory_space<vmem>>, vector<8x28xbf16>,
    %65 = arith.truncf %60 : vector<8x100xf32> to vector<8x100xbf16>
    %c0_61 = arith.constant 0 : index
    %c128 = arith.constant 128 : index
    %66 = vector.load %arg13[%c0_61, %c128] : memref<8x256xbf16, #tpu.memory_space<vmem>>, vector<8x100xbf16>
    tpu.vector_store %arg13[%c0_61, %c128], %65 {strides = array<i32>} : memref<8x256xbf16, #tpu.memory_space<vmem>>, vector<8x100xbf16>,
    %c0_62 = arith.constant 0 : index
    %c117 = arith.constant 117 : index
    %67 = vector.load %arg13[%c0_62, %c117] : memref<8x256xbf16, #tpu.memory_space<vmem>>, vector<8x100xbf16>
    %c0_63 = arith.constant 0 : index
    %c0_64 = arith.constant 0 : index
    %c0_65 = arith.constant 0 : index
    %68 = vector.load %arg8[%c0_63, %c0_64, %c0_65] : memref<9x8x8xbf16, #tpu.memory_space<vmem>>, vector<1x8x8xbf16>
    %69 = vector.shape_cast %68 : vector<1x8x8xbf16> to vector<8x8xbf16>
    %cst_66 = arith.constant dense<0.000000e+00> : vector<8x100xf32>
    %70 = tpu.matmul %69, %67, %cst_66 {dimension_numbers = #tpu.dot_dimension_numbers<[1], [0], [0], [1], [0, 0, 1, 1], [], []>} : vector<8x8xbf16>, vector<8x100xbf16>, vector<8x100xf32> -> vector<8x100xf32>
    %c0_67 = arith.constant 0 : index
    %c118 = arith.constant 118 : index
    %71 = vector.load %arg13[%c0_67, %c118] : memref<8x256xbf16, #tpu.memory_space<vmem>>, vector<8x100xbf16>
    %c1_68 = arith.constant 1 : index
    %c0_69 = arith.constant 0 : index
    %c0_70 = arith.constant 0 : index
    %72 = vector.load %arg8[%c1_68, %c0_69, %c0_70] : memref<9x8x8xbf16, #tpu.memory_space<vmem>>, vector<1x8x8xbf16>
    %73 = vector.shape_cast %72 : vector<1x8x8xbf16> to vector<8x8xbf16>
    %cst_71 = arith.constant dense<0.000000e+00> : vector<8x100xf32>
    %74 = tpu.matmul %73, %71, %cst_71 {dimension_numbers = #tpu.dot_dimension_numbers<[1], [0], [0], [1], [0, 0, 1, 1], [], []>} : vector<8x8xbf16>, vector<8x100xbf16>, vector<8x100xf32> -> vector<8x100xf32>
    %75 = arith.addf %70, %74 : vector<8x100xf32>
    %c0_72 = arith.constant 0 : index
    %c119 = arith.constant 119 : index
    %76 = vector.load %arg13[%c0_72, %c119] : memref<8x256xbf16, #tpu.memory_space<vmem>>, vector<8x100xbf16>
    %c2_73 = arith.constant 2 : index
    %c0_74 = arith.constant 0 : index
    %c0_75 = arith.constant 0 : index
    %77 = vector.load %arg8[%c2_73, %c0_74, %c0_75] : memref<9x8x8xbf16, #tpu.memory_space<vmem>>, vector<1x8x8xbf16>
    %78 = vector.shape_cast %77 : vector<1x8x8xbf16> to vector<8x8xbf16>
    %cst_76 = arith.constant dense<0.000000e+00> : vector<8x100xf32>
    %79 = tpu.matmul %78, %76, %cst_76 {dimension_numbers = #tpu.dot_dimension_numbers<[1], [0], [0], [1], [0, 0, 1, 1], [], []>} : vector<8x8xbf16>, vector<8x100xbf16>, vector<8x100xf32> -> vector<8x100xf32>
    %80 = arith.addf %75, %79 : vector<8x100xf32>
    %c0_77 = arith.constant 0 : index
    %c127 = arith.constant 127 : index
    %81 = vector.load %arg13[%c0_77, %c127] : memref<8x256xbf16, #tpu.memory_space<vmem>>, vector<8x100xbf16>
    %c3_78 = arith.constant 3 : index
    %c0_79 = arith.constant 0 : index
    %c0_80 = arith.constant 0 : index
    %82 = vector.load %arg8[%c3_78, %c0_79, %c0_80] : memref<9x8x8xbf16, #tpu.memory_space<vmem>>, vector<1x8x8xbf16>
    %83 = vector.shape_cast %82 : vector<1x8x8xbf16> to vector<8x8xbf16>
    %cst_81 = arith.constant dense<0.000000e+00> : vector<8x100xf32>
    %84 = tpu.matmul %83, %81, %cst_81 {dimension_numbers = #tpu.dot_dimension_numbers<[1], [0], [0], [1], [0, 0, 1, 1], [], []>} : vector<8x8xbf16>, vector<8x100xbf16>, vector<8x100xf32> -> vector<8x100xf32>
    %85 = arith.addf %80, %84 : vector<8x100xf32>
    %c0_82 = arith.constant 0 : index
    %c128_83 = arith.constant 128 : index
    %86 = vector.load %arg13[%c0_82, %c128_83] : memref<8x256xbf16, #tpu.memory_space<vmem>>, vector<8x100xbf16>
    %c4_84 = arith.constant 4 : index
    %c0_85 = arith.constant 0 : index
    %c0_86 = arith.constant 0 : index
    %87 = vector.load %arg8[%c4_84, %c0_85, %c0_86] : memref<9x8x8xbf16, #tpu.memory_space<vmem>>, vector<1x8x8xbf16>
    %88 = vector.shape_cast %87 : vector<1x8x8xbf16> to vector<8x8xbf16>
    %cst_87 = arith.constant dense<0.000000e+00> : vector<8x100xf32>
    %89 = tpu.matmul %88, %86, %cst_87 {dimension_numbers = #tpu.dot_dimension_numbers<[1], [0], [0], [1], [0, 0, 1, 1], [], []>} : vector<8x8xbf16>, vector<8x100xbf16>, vector<8x100xf32> -> vector<8x100xf32>
    %90 = arith.addf %85, %89 : vector<8x100xf32>
    %c0_88 = arith.constant 0 : index
    %c129 = arith.constant 129 : index
    %91 = vector.load %arg13[%c0_88, %c129] : memref<8x256xbf16, #tpu.memory_space<vmem>>, vector<8x100xbf16>
    %c5_89 = arith.constant 5 : index
    %c0_90 = arith.constant 0 : index
    %c0_91 = arith.constant 0 : index
    %92 = vector.load %arg8[%c5_89, %c0_90, %c0_91] : memref<9x8x8xbf16, #tpu.memory_space<vmem>>, vector<1x8x8xbf16>
    %93 = vector.shape_cast %92 : vector<1x8x8xbf16> to vector<8x8xbf16>
    %cst_92 = arith.constant dense<0.000000e+00> : vector<8x100xf32>
    %94 = tpu.matmul %93, %91, %cst_92 {dimension_numbers = #tpu.dot_dimension_numbers<[1], [0], [0], [1], [0, 0, 1, 1], [], []>} : vector<8x8xbf16>, vector<8x100xbf16>, vector<8x100xf32> -> vector<8x100xf32>
    %95 = arith.addf %90, %94 : vector<8x100xf32>
    %c0_93 = arith.constant 0 : index
    %c137 = arith.constant 137 : index
    %96 = vector.load %arg13[%c0_93, %c137] : memref<8x256xbf16, #tpu.memory_space<vmem>>, vector<8x100xbf16>
    %c6_94 = arith.constant 6 : index
    %c0_95 = arith.constant 0 : index
    %c0_96 = arith.constant 0 : index
    %97 = vector.load %arg8[%c6_94, %c0_95, %c0_96] : memref<9x8x8xbf16, #tpu.memory_space<vmem>>, vector<1x8x8xbf16>
    %98 = vector.shape_cast %97 : vector<1x8x8xbf16> to vector<8x8xbf16>
    %cst_97 = arith.constant dense<0.000000e+00> : vector<8x100xf32>
    %99 = tpu.matmul %98, %96, %cst_97 {dimension_numbers = #tpu.dot_dimension_numbers<[1], [0], [0], [1], [0, 0, 1, 1], [], []>} : vector<8x8xbf16>, vector<8x100xbf16>, vector<8x100xf32> -> vector<8x100xf32>
    %100 = arith.addf %95, %99 : vector<8x100xf32>
    %c0_98 = arith.constant 0 : index
    %c138 = arith.constant 138 : index
    %101 = vector.load %arg13[%c0_98, %c138] : memref<8x256xbf16, #tpu.memory_space<vmem>>, vector<8x100xbf16>
    %c7_99 = arith.constant 7 : index
    %c0_100 = arith.constant 0 : index
    %c0_101 = arith.constant 0 : index
    %102 = vector.load %arg8[%c7_99, %c0_100, %c0_101] : memref<9x8x8xbf16, #tpu.memory_space<vmem>>, vector<1x8x8xbf16>
    %103 = vector.shape_cast %102 : vector<1x8x8xbf16> to vector<8x8xbf16>
    %cst_102 = arith.constant dense<0.000000e+00> : vector<8x100xf32>
    %104 = tpu.matmul %103, %101, %cst_102 {dimension_numbers = #tpu.dot_dimension_numbers<[1], [0], [0], [1], [0, 0, 1, 1], [], []>} : vector<8x8xbf16>, vector<8x100xbf16>, vector<8x100xf32> -> vector<8x100xf32>
    %105 = arith.addf %100, %104 : vector<8x100xf32>
    %c0_103 = arith.constant 0 : index
    %c139 = arith.constant 139 : index
    %106 = vector.load %arg13[%c0_103, %c139] : memref<8x256xbf16, #tpu.memory_space<vmem>>, vector<8x100xbf16>
    %c8_104 = arith.constant 8 : index
    %c0_105 = arith.constant 0 : index
    %c0_106 = arith.constant 0 : index
    %107 = vector.load %arg8[%c8_104, %c0_105, %c0_106] : memref<9x8x8xbf16, #tpu.memory_space<vmem>>, vector<1x8x8xbf16>
    %108 = vector.shape_cast %107 : vector<1x8x8xbf16> to vector<8x8xbf16>
    %cst_107 = arith.constant dense<0.000000e+00> : vector<8x100xf32>
    %109 = tpu.matmul %108, %106, %cst_107 {dimension_numbers = #tpu.dot_dimension_numbers<[1], [0], [0], [1], [0, 0, 1, 1], [], []>} : vector<8x8xbf16>, vector<8x100xbf16>, vector<8x100xf32> -> vector<8x100xf32>
    %110 = arith.addf %105, %109 : vector<8x100xf32>
    %c0_108 = arith.constant 0 : index
    %c0_109 = arith.constant 0 : index
    %111 = vector.load %arg9[%c0_108, %c0_109] : memref<8x1xf32, #tpu.memory_space<vmem>>, vector<8x1xf32>
    %112 = vector.broadcast %111 : vector<8x1xf32> to vector<8x100xf32>
    %113 = arith.addf %110, %112 : vector<8x100xf32>
    %c0_110 = arith.constant 0 : index
    %c0_111 = arith.constant 0 : index
    %c0_112 = arith.constant 0 : index
    %114 = vector.load %arg4[%c0_110, %c0_111, %c0_112] : memref<1x4x128xbf16, #tpu.memory_space<vmem>>, vector<1x4x100xbf16>
    %115 = vector.shape_cast %114 : vector<1x4x100xbf16> to vector<4x100xbf16>
    %c0_113 = arith.constant 0 : index
    %c0_114 = arith.constant 0 : index
    %116 = vector.load %arg10[%c0_113, %c0_114] : memref<8x4xbf16, #tpu.memory_space<vmem>>, vector<8x4xbf16>
    %cst_115 = arith.constant dense<0.000000e+00> : vector<8x100xf32>
    %117 = tpu.matmul %116, %115, %cst_115 {dimension_numbers = #tpu.dot_dimension_numbers<[1], [0], [0], [1], [0, 0, 1, 1], [], []>} : vector<8x4xbf16>, vector<4x100xbf16>, vector<8x100xf32> -> vector<8x100xf32>
    %c0_116 = arith.constant 0 : index
    %c0_117 = arith.constant 0 : index
    %118 = vector.load %arg11[%c0_116, %c0_117] : memref<8x1xf32, #tpu.memory_space<vmem>>, vector<8x1xf32>
    %119 = vector.broadcast %118 : vector<8x1xf32> to vector<8x100xf32>
    %120 = arith.addf %117, %119 : vector<8x100xf32>
    %121 = arith.addf %113, %120 : vector<8x100xf32>
    %cst_118 = arith.constant 0.000000e+00 : f32
    %122 = vector.broadcast %cst_118 : f32 to vector<8x100xf32>
    %123 = arith.maximumf %121, %122 : vector<8x100xf32>
    %c0_119 = arith.constant 0 : index
    %c0_120 = arith.constant 0 : index
    %c0_121 = arith.constant 0 : index
    %124 = vector.load %arg12[%c0_119, %c0_120, %c0_121] : memref<1x8x100xf32, #tpu.memory_space<vmem>>, vector<1x8x100xf32>
    %125 = vector.shape_cast %124 : vector<1x8x100xf32> to vector<8x100xf32>
    %126 = vector.shape_cast %123 : vector<8x100xf32> to vector<1x8x100xf32>
    tpu.vector_store %arg12[%c0_119, %c0_120, %c0_121], %126 {strides = array<i32>} : memref<1x8x100xf32, #tpu.memory_space<vmem>>, vector<1x8x100xf32>,
    return
  }
  func.func @transform_0(%arg0: i32) -> (i32, i32, i32) {
    %c0_i32 = arith.constant 0 : i32
    %c0_i32_0 = arith.constant 0 : i32
    %c0_i32_1 = arith.constant 0 : i32
    return %arg0, %c0_i32, %c0_i32_0 : i32, i32, i32
  }
  func.func @transform_1(%arg0: i32) -> (i32, i32, i32) {
    %c0_i32 = arith.constant 0 : i32
    %c0_i32_0 = arith.constant 0 : i32
    %c0_i32_1 = arith.constant 0 : i32
    return %arg0, %c0_i32, %c0_i32_0 : i32, i32, i32
  }
  func.func @transform_2(%arg0: i32) -> (i32, i32, i32) {
    %c0_i32 = arith.constant 0 : i32
    %c0_i32_0 = arith.constant 0 : i32
    %c0_i32_1 = arith.constant 0 : i32
    return %arg0, %c0_i32, %c0_i32_0 : i32, i32, i32
  }
  func.func @transform_3(%arg0: i32) -> (i32, i32, i32) {
    %c0_i32 = arith.constant 0 : i32
    %c0_i32_0 = arith.constant 0 : i32
    %c0_i32_1 = arith.constant 0 : i32
    return %arg0, %c0_i32, %c0_i32_0 : i32, i32, i32
  }
  func.func @transform_4(%arg0: i32) -> (i32, i32) {
    %c0_i32 = arith.constant 0 : i32
    %c0_i32_0 = arith.constant 0 : i32
    %c0_i32_1 = arith.constant 0 : i32
    return %c0_i32, %c0_i32_0 : i32, i32
  }
  func.func @transform_5(%arg0: i32) -> (i32, i32, i32) {
    %c0_i32 = arith.constant 0 : i32
    %c0_i32_0 = arith.constant 0 : i32
    %c0_i32_1 = arith.constant 0 : i32
    %c0_i32_2 = arith.constant 0 : i32
    return %c0_i32, %c0_i32_0, %c0_i32_1 : i32, i32, i32
  }
  func.func @transform_6(%arg0: i32) -> (i32, i32) {
    %c0_i32 = arith.constant 0 : i32
    %c0_i32_0 = arith.constant 0 : i32
    %c0_i32_1 = arith.constant 0 : i32
    return %c0_i32, %c0_i32_0 : i32, i32
  }
  func.func @transform_7(%arg0: i32) -> (i32, i32, i32) {
    %c0_i32 = arith.constant 0 : i32
    %c0_i32_0 = arith.constant 0 : i32
    %c0_i32_1 = arith.constant 0 : i32
    %c0_i32_2 = arith.constant 0 : i32
    return %c0_i32, %c0_i32_0, %c0_i32_1 : i32, i32, i32
  }
  func.func @transform_8(%arg0: i32) -> (i32, i32) {
    %c0_i32 = arith.constant 0 : i32
    %c0_i32_0 = arith.constant 0 : i32
    %c0_i32_1 = arith.constant 0 : i32
    return %c0_i32, %c0_i32_0 : i32, i32
  }
  func.func @transform_9(%arg0: i32) -> (i32, i32) {
    %c0_i32 = arith.constant 0 : i32
    %c0_i32_0 = arith.constant 0 : i32
    %c0_i32_1 = arith.constant 0 : i32
    return %c0_i32, %c0_i32_0 : i32, i32
  }
  func.func @transform_10(%arg0: i32) -> (i32, i32) {
    %c0_i32 = arith.constant 0 : i32
    %c0_i32_0 = arith.constant 0 : i32
    %c0_i32_1 = arith.constant 0 : i32
    return %c0_i32, %c0_i32_0 : i32, i32
  }
  func.func @transform_11(%arg0: i32) -> (i32, i32, i32) {
    %c0_i32 = arith.constant 0 : i32
    %c0_i32_0 = arith.constant 0 : i32
    %c0_i32_1 = arith.constant 0 : i32
    return %arg0, %c0_i32, %c0_i32_0 : i32, i32, i32
  }
}

</mosaic_0001>

<llo_original>
// kernel: tpu_custom_call.1
$region0: #{tpu_custom_call.1}
  #allocation0 [shape = 'u32[]', space=smem, size = 0x4, offset = 0x4, fixed_abs, tag = 'smem constant byte address 0x4 - core index']
  #allocation1 [shape = 'u32[72,128]{1,0:T(1,128)}', space=vmem, size = 0x9000, scoped, tag = 'internal scratch']
  #allocation2 [shape = 'bf16[8,256]{1,0:T(8,128)(2,1)}', space=vmem, size = 0x1000, scoped, tag = 'scratch operand']
  %s0 = inlined_call_operand.vmem [shape: bf16[2,4,128], index: 0, kind: input, shape index: {}]
  %s1 = inlined_call_operand.vmem [shape: bf16[2,4,128], index: 1, kind: input, shape index: {}]
  %s2 = inlined_call_operand.vmem [shape: bf16[2,4,128], index: 2, kind: input, shape index: {}]
  %s3 = inlined_call_operand.vmem [shape: bf16[2,4,128], index: 3, kind: input, shape index: {}]
  %s4 = inlined_call_operand.vmem [shape: f32[1,100], index: 4, kind: input, shape index: {}]
  %s5 = inlined_call_operand.vmem [shape: bf16[9,8,4], index: 5, kind: input, shape index: {}]
  %s6 = inlined_call_operand.vmem [shape: f32[8,1], index: 6, kind: input, shape index: {}]
  %s7 = inlined_call_operand.vmem [shape: bf16[9,8,8], index: 7, kind: input, shape index: {}]
  %s8 = inlined_call_operand.vmem [shape: f32[8,1], index: 8, kind: input, shape index: {}]
  %s9 = inlined_call_operand.vmem [shape: bf16[8,4], index: 9, kind: input, shape index: {}]
  %s10 = inlined_call_operand.vmem [shape: f32[8,1], index: 10, kind: input, shape index: {}]
  %s11 = inlined_call_operand.hbm [shape: f32[2,8,100], index: 11, kind: output, shape index: {}]
  %s12 = sld [smem:[#allocation0]]
  $region77: #{tpu_custom_call.1} parent=0
    _
  %s14 = ssub.s32 1, %s12
  %s15 = scalar_select 0, %s14, %s12
  $region1: #{tpu_custom_call.1} parent=0
    #allocation3 [shape = 'u8[8192]{0}', space=vmem, size = 0x2000, scoped, tag = 'output window, operand 0']
    #allocation4 [shape = 's32[2]{0}', space=sflag, size = 0x8, scoped, tag = 'scoped memory for tpu_custom_call.1']
    %16 = vsyncpa [#allocation4], 0
    %s17 = scalar_lea.sflag [#allocation4], 1
    %18 = vsyncpa %s17, 0
    loop: start=0, step=1, limit=4
    $region2: #{tpu_custom_call.1} parent=1 // loop_pre_header
      _
    $region3: #{tpu_custom_call.1} parent=1 // loop_header
      %s20 = sphi 0, %s24
      %p21 = scmp.ge.s32.totalorder %s20, 4
      %s30 = sphi 0, %s32
      %s33 = sphi 0, %s30
      %s34 = sphi 0, %s33
      %s50 = sphi 0, %s34
      %s56 = sphi 0, %s58
      %s59 = sphi 0, %s56
      %s60 = sphi 0, %s59
      %s76 = sphi 0, %s60
      %s82 = sphi 0, %s84
      %s85 = sphi 0, %s82
      %s86 = sphi 0, %s85
      %s102 = sphi 0, %s86
      %s108 = sphi 0, %s110
      %s111 = sphi 0, %s108
      %s112 = sphi 0, %s111
      %s128 = sphi 0, %s112
      %s132 = sphi 0, %s132
      %s134 = sphi 0, %s132
      %s135 = sphi 0, %s134
      %s149 = sphi 0, %s135
      %s153 = sphi 0, %s153
      %s155 = sphi 0, %s153
      %s156 = sphi 0, %s155
      %s170 = sphi 0, %s156
      %s174 = sphi 0, %s174
      %s176 = sphi 0, %s174
      %s177 = sphi 0, %s176
      %s191 = sphi 0, %s177
      %s195 = sphi 0, %s195
      %s197 = sphi 0, %s195
      %s198 = sphi 0, %s197
      %s212 = sphi 0, %s198
      %s216 = sphi 0, %s216
      %s218 = sphi 0, %s216
      %s219 = sphi 0, %s218
      %s233 = sphi 0, %s219
      %s237 = sphi 0, %s237
      %s239 = sphi 0, %s237
      %s240 = sphi 0, %s239
      %s254 = sphi 0, %s240
      %s258 = sphi 0, %s258
      %s260 = sphi 0, %s258
      %s261 = sphi 0, %s260
      %s275 = sphi 0, %s261
      %s281 = sphi 0, %s283
      %s284 = sphi 0, %s281
      %s285 = sphi 0, %s284
      %s301 = sphi 0, %s285
    $region4: #{tpu_custom_call.1} parent=1 // loop_header_branch
      %23 = sbr.rel (%p21) target = $region8
    $region5: #{tpu_custom_call.1} parent=1 // loop_body
      %s25 = ssub.s32 %s20, 1
      %s26 = ssub.s32 %s20, 2
      %s27 = sadd.s32 %s20, 1
      %s28 = ssub.s32 %s20, %s27
      %p29 = scmp.eq.s32.totalorder %s28, 0
      %s31 = sadd.s32 %s30, 1
      %s32 = scalar_select %p29, %s30, %s31
      %p35 = pneg %p29
      %p36 = scmp.eq.s32.totalorder %s20, 1
      %p37 = por %p35, %p36
      %p38 = scmp.ne.s32.totalorder %s30, %s33
      %p39 = scmp.eq.s32.totalorder %s20, 0
      %p40 = por %p38, %p39
      %p41 = scmp.ne.s32.totalorder %s30, %s33
      %p42 = scmp.eq.s32.totalorder %s25, 1
      %p43 = por %p41, %p42
      %p44 = scmp.ne.s32.totalorder %s33, %s34
      %p45 = scmp.eq.s32.totalorder %s25, 0
      %p46 = por %p44, %p45
      %p47 = scmp.ne.s32.totalorder %s33, %s34
      %p48 = scmp.eq.s32.totalorder %s26, 1
      %p49 = por %p47, %p48
      %p51 = scmp.ne.s32.totalorder %s34, %s50
      %p52 = scmp.eq.s32.totalorder %s26, 0
      %p53 = por %p51, %p52
      %s54 = ssub.s32 %s20, %s27
      %p55 = scmp.eq.s32.totalorder %s54, 0
      %s57 = sadd.s32 %s56, 1
      %s58 = scalar_select %p55, %s56, %s57
      %p61 = pneg %p55
      %p62 = scmp.eq.s32.totalorder %s20, 1
      %p63 = por %p61, %p62
      %p64 = scmp.ne.s32.totalorder %s56, %s59
      %p65 = scmp.eq.s32.totalorder %s20, 0
      %p66 = por %p64, %p65
      %p67 = scmp.ne.s32.totalorder %s56, %s59
      %p68 = scmp.eq.s32.totalorder %s25, 1
      %p69 = por %p67, %p68
      %p70 = scmp.ne.s32.totalorder %s59, %s60
      %p71 = scmp.eq.s32.totalorder %s25, 0
      %p72 = por %p70, %p71
      %p73 = scmp.ne.s32.totalorder %s59, %s60
      %p74 = scmp.eq.s32.totalorder %s26, 1
      %p75 = por %p73, %p74
      %p77 = scmp.ne.s32.totalorder %s60, %s76
      %p78 = scmp.eq.s32.totalorder %s26, 0
      %p79 = por %p77, %p78
      %s80 = ssub.s32 %s20, %s27
      %p81 = scmp.eq.s32.totalorder %s80, 0
      %s83 = sadd.s32 %s82, 1
      %s84 = scalar_select %p81, %s82, %s83
      %p87 = pneg %p81
      %p88 = scmp.eq.s32.totalorder %s20, 1
      %p89 = por %p87, %p88
      %p90 = scmp.ne.s32.totalorder %s82, %s85
      %p91 = scmp.eq.s32.totalorder %s20, 0
      %p92 = por %p90, %p91
      %p93 = scmp.ne.s32.totalorder %s82, %s85
      %p94 = scmp.eq.s32.totalorder %s25, 1
      %p95 = por %p93, %p94
      %p96 = scmp.ne.s32.totalorder %s85, %s86
      %p97 = scmp.eq.s32.totalorder %s25, 0
      %p98 = por %p96, %p97
      %p99 = scmp.ne.s32.totalorder %s85, %s86
      %p100 = scmp.eq.s32.totalorder %s26, 1
      %p101 = por %p99, %p100
      %p103 = scmp.ne.s32.totalorder %s86, %s102
      %p104 = scmp.eq.s32.totalorder %s26, 0
      %p105 = por %p103, %p104
      %s106 = ssub.s32 %s20, %s27
      %p107 = scmp.eq.s32.totalorder %s106, 0
      %s109 = sadd.s32 %s108, 1
      %s110 = scalar_select %p107, %s108, %s109
      %p113 = pneg %p107
      %p114 = scmp.eq.s32.totalorder %s20, 1
      %p115 = por %p113, %p114
      %p116 = scmp.ne.s32.totalorder %s108, %s111
      %p117 = scmp.eq.s32.totalorder %s20, 0
      %p118 = por %p116, %p117
      %p119 = scmp.ne.s32.totalorder %s108, %s111
      %p120 = scmp.eq.s32.totalorder %s25, 1
      %p121 = por %p119, %p120
      %p122 = scmp.ne.s32.totalorder %s111, %s112
      %p123 = scmp.eq.s32.totalorder %s25, 0
      %p124 = por %p122, %p123
      %p125 = scmp.ne.s32.totalorder %s111, %s112
      %p126 = scmp.eq.s32.totalorder %s26, 1
      %p127 = por %p125, %p126
      %p129 = scmp.ne.s32.totalorder %s112, %s128
      %p130 = scmp.eq.s32.totalorder %s26, 0
      %p131 = por %p129, %p130
      %s133 = sadd.s32 %s132, 1
      %p136 = scmp.eq.s32.totalorder %s20, 1
      %p137 = scmp.ne.s32.totalorder %s132, %s134
      %p138 = scmp.eq.s32.totalorder %s20, 0
      %p139 = por %p137, %p138
      %p140 = scmp.ne.s32.totalorder %s132, %s134
      %p141 = scmp.eq.s32.totalorder %s25, 1
      %p142 = por %p140, %p141
      %p143 = scmp.ne.s32.totalorder %s134, %s135
      %p144 = scmp.eq.s32.totalorder %s25, 0
      %p145 = por %p143, %p144
      %p146 = scmp.ne.s32.totalorder %s134, %s135
      %p147 = scmp.eq.s32.totalorder %s26, 1
      %p148 = por %p146, %p147
      %p150 = scmp.ne.s32.totalorder %s135, %s149
      %p151 = scmp.eq.s32.totalorder %s26, 0
      %p152 = por %p150, %p151
      %s154 = sadd.s32 %s153, 1
      %p157 = scmp.eq.s32.totalorder %s20, 1
      %p158 = scmp.ne.s32.totalorder %s153, %s155
      %p159 = scmp.eq.s32.totalorder %s20, 0
      %p160 = por %p158, %p159
      %p161 = scmp.ne.s32.totalorder %s153, %s155
      %p162 = scmp.eq.s32.totalorder %s25, 1
      %p163 = por %p161, %p162
      %p164 = scmp.ne.s32.totalorder %s155, %s156
      %p165 = scmp.eq.s32.totalorder %s25, 0
      %p166 = por %p164, %p165
      %p167 = scmp.ne.s32.totalorder %s155, %s156
      %p168 = scmp.eq.s32.totalorder %s26, 1
      %p169 = por %p167, %p168
      %p171 = scmp.ne.s32.totalorder %s156, %s170
      %p172 = scmp.eq.s32.totalorder %s26, 0
      %p173 = por %p171, %p172
      %s175 = sadd.s32 %s174, 1
      %p178 = scmp.eq.s32.totalorder %s20, 1
      %p179 = scmp.ne.s32.totalorder %s174, %s176
      %p180 = scmp.eq.s32.totalorder %s20, 0
      %p181 = por %p179, %p180
      %p182 = scmp.ne.s32.totalorder %s174, %s176
      %p183 = scmp.eq.s32.totalorder %s25, 1
      %p184 = por %p182, %p183
      %p185 = scmp.ne.s32.totalorder %s176, %s177
      %p186 = scmp.eq.s32.totalorder %s25, 0
      %p187 = por %p185, %p186
      %p188 = scmp.ne.s32.totalorder %s176, %s177
      %p189 = scmp.eq.s32.totalorder %s26, 1
      %p190 = por %p188, %p189
      %p192 = scmp.ne.s32.totalorder %s177, %s191
      %p193 = scmp.eq.s32.totalorder %s26, 0
      %p194 = por %p192, %p193
      %s196 = sadd.s32 %s195, 1
      %p199 = scmp.eq.s32.totalorder %s20, 1
      %p200 = scmp.ne.s32.totalorder %s195, %s197
      %p201 = scmp.eq.s32.totalorder %s20, 0
      %p202 = por %p200, %p201
      %p203 = scmp.ne.s32.totalorder %s195, %s197
      %p204 = scmp.eq.s32.totalorder %s25, 1
      %p205 = por %p203, %p204
      %p206 = scmp.ne.s32.totalorder %s197, %s198
      %p207 = scmp.eq.s32.totalorder %s25, 0
      %p208 = por %p206, %p207
      %p209 = scmp.ne.s32.totalorder %s197, %s198
      %p210 = scmp.eq.s32.totalorder %s26, 1
      %p211 = por %p209, %p210
      %p213 = scmp.ne.s32.totalorder %s198, %s212
      %p214 = scmp.eq.s32.totalorder %s26, 0
      %p215 = por %p213, %p214
      %s217 = sadd.s32 %s216, 1
      %p220 = scmp.eq.s32.totalorder %s20, 1
      %p221 = scmp.ne.s32.totalorder %s216, %s218
      %p222 = scmp.eq.s32.totalorder %s20, 0
      %p223 = por %p221, %p222
      %p224 = scmp.ne.s32.totalorder %s216, %s218
      %p225 = scmp.eq.s32.totalorder %s25, 1
      %p226 = por %p224, %p225
      %p227 = scmp.ne.s32.totalorder %s218, %s219
      %p228 = scmp.eq.s32.totalorder %s25, 0
      %p229 = por %p227, %p228
      %p230 = scmp.ne.s32.totalorder %s218, %s219
      %p231 = scmp.eq.s32.totalorder %s26, 1
      %p232 = por %p230, %p231
      %p234 = scmp.ne.s32.totalorder %s219, %s233
      %p235 = scmp.eq.s32.totalorder %s26, 0
      %p236 = por %p234, %p235
      %s238 = sadd.s32 %s237, 1
      %p241 = scmp.eq.s32.totalorder %s20, 1
      %p242 = scmp.ne.s32.totalorder %s237, %s239
      %p243 = scmp.eq.s32.totalorder %s20, 0
      %p244 = por %p242, %p243
      %p245 = scmp.ne.s32.totalorder %s237, %s239
      %p246 = scmp.eq.s32.totalorder %s25, 1
      %p247 = por %p245, %p246
      %p248 = scmp.ne.s32.totalorder %s239, %s240
      %p249 = scmp.eq.s32.totalorder %s25, 0
      %p250 = por %p248, %p249
      %p251 = scmp.ne.s32.totalorder %s239, %s240
      %p252 = scmp.eq.s32.totalorder %s26, 1
      %p253 = por %p251, %p252
      %p255 = scmp.ne.s32.totalorder %s240, %s254
      %p256 = scmp.eq.s32.totalorder %s26, 0
      %p257 = por %p255, %p256
      %s259 = sadd.s32 %s258, 1
      %p262 = scmp.eq.s32.totalorder %s20, 1
      %p263 = scmp.ne.s32.totalorder %s258, %s260
      %p264 = scmp.eq.s32.totalorder %s20, 0
      %p265 = por %p263, %p264
      %p266 = scmp.ne.s32.totalorder %s258, %s260
      %p267 = scmp.eq.s32.totalorder %s25, 1
      %p268 = por %p266, %p267
      %p269 = scmp.ne.s32.totalorder %s260, %s261
      %p270 = scmp.eq.s32.totalorder %s25, 0
      %p271 = por %p269, %p270
      %p272 = scmp.ne.s32.totalorder %s260, %s261
      %p273 = scmp.eq.s32.totalorder %s26, 1
      %p274 = por %p272, %p273
      %p276 = scmp.ne.s32.totalorder %s261, %s275
      %p277 = scmp.eq.s32.totalorder %s26, 0
      %p278 = por %p276, %p277
      %s279 = ssub.s32 %s20, %s27
      %p280 = scmp.eq.s32.totalorder %s279, 0
      %s282 = sadd.s32 %s281, 1
      %s283 = scalar_select %p280, %s281, %s282
      %p286 = pneg %p280
      %p287 = scmp.eq.s32.totalorder %s20, 1
      %p288 = por %p286, %p287
      %p289 = scmp.ne.s32.totalorder %s281, %s284
      %p290 = scmp.eq.s32.totalorder %s20, 0
      %p291 = por %p289, %p290
      %p292 = scmp.ne.s32.totalorder %s281, %s284
      %p293 = scmp.eq.s32.totalorder %s25, 1
      %p294 = por %p292, %p293
      %p295 = scmp.ne.s32.totalorder %s284, %s285
      %p296 = scmp.eq.s32.totalorder %s25, 0
      %p297 = por %p295, %p296
      %p298 = scmp.ne.s32.totalorder %s284, %s285
      %p299 = scmp.eq.s32.totalorder %s26, 1
      %p300 = por %p298, %p299
      %p302 = scmp.ne.s32.totalorder %s285, %s301
      %p303 = scmp.eq.s32.totalorder %s26, 0
      %p304 = por %p302, %p303
      %p305 = scmp.le.s32.totalorder 1, %s20
      %p306 = scmp.lt.s32.totalorder %s20, 3
      %p307 = pnand %p305, %p306
      %p308 = pneg %p307
      // Predicated region
      $region9: #{tpu_custom_call.1} parent=5 // pred_check
        _
      $region10: #{tpu_custom_call.1} parent=5 // pred_check_branch
        %310 = sbr.rel (%p307) target = $region12
      $region11: #{tpu_custom_call.1} parent=5 // pred_region
        %s311 = ssub.s32 %s20, 1
        // Predicated region
        $region13: #{tpu_custom_call.1} parent=11 // pred_check
          %p312 = pneg %p145
        $region14: #{tpu_custom_call.1} parent=11 // pred_check_branch
          %314 = sbr.rel (%p312) target = $region16
        $region15: #{tpu_custom_call.1} parent=11 // pred_region
          _
        $region16: #{tpu_custom_call.1} parent=11 // pred_fallthru
          _
        // Predicated region
        $region17: #{tpu_custom_call.1} parent=11 // pred_check
          %p315 = pneg %p166
        $region18: #{tpu_custom_call.1} parent=11 // pred_check_branch
          %317 = sbr.rel (%p315) target = $region20
        $region19: #{tpu_custom_call.1} parent=11 // pred_region
          _
        $region20: #{tpu_custom_call.1} parent=11 // pred_fallthru
          _
        // Predicated region
        $region21: #{tpu_custom_call.1} parent=11 // pred_check
          %p318 = pneg %p187
        $region22: #{tpu_custom_call.1} parent=11 // pred_check_branch
          %320 = sbr.rel (%p318) target = $region24
        $region23: #{tpu_custom_call.1} parent=11 // pred_region
          _
        $region24: #{tpu_custom_call.1} parent=11 // pred_fallthru
          _
        // Predicated region
        $region25: #{tpu_custom_call.1} parent=11 // pred_check
          %p321 = pneg %p208
        $region26: #{tpu_custom_call.1} parent=11 // pred_check_branch
          %323 = sbr.rel (%p321) target = $region28
        $region27: #{tpu_custom_call.1} parent=11 // pred_region
          _
        $region28: #{tpu_custom_call.1} parent=11 // pred_fallthru
          _
        // Predicated region
        $region29: #{tpu_custom_call.1} parent=11 // pred_check
          %p324 = pneg %p229
        $region30: #{tpu_custom_call.1} parent=11 // pred_check_branch
          %326 = sbr.rel (%p324) target = $region32
        $region31: #{tpu_custom_call.1} parent=11 // pred_region
          _
        $region32: #{tpu_custom_call.1} parent=11 // pred_fallthru
          _
        // Predicated region
        $region33: #{tpu_custom_call.1} parent=11 // pred_check
          %p327 = pneg %p250
        $region34: #{tpu_custom_call.1} parent=11 // pred_check_branch
          %329 = sbr.rel (%p327) target = $region36
        $region35: #{tpu_custom_call.1} parent=11 // pred_region
          _
        $region36: #{tpu_custom_call.1} parent=11 // pred_fallthru
          _
        // Predicated region
        $region37: #{tpu_custom_call.1} parent=11 // pred_check
          %p330 = pneg %p271
        $region38: #{tpu_custom_call.1} parent=11 // pred_check_branch
          %332 = sbr.rel (%p330) target = $region40
        $region39: #{tpu_custom_call.1} parent=11 // pred_region
          _
        $region40: #{tpu_custom_call.1} parent=11 // pred_fallthru
          _
      $region12: #{tpu_custom_call.1} parent=5 // pred_fallthru
        _
      %p333 = scmp.lt.s32.totalorder %s20, 2
      // Predicated region
      $region41: #{tpu_custom_call.1} parent=5 // pred_check
        %p334 = pneg %p333
      $region42: #{tpu_custom_call.1} parent=5 // pred_check_branch
        %336 = sbr.rel (%p334) target = $region44
      $region43: #{tpu_custom_call.1} parent=5 // pred_region
        // Predicated region
        $region45: #{tpu_custom_call.1} parent=43 // pred_check
          %p337 = pneg %p40
        $region46: #{tpu_custom_call.1} parent=43 // pred_check_branch
          %339 = sbr.rel (%p337) target = $region48
        $region47: #{tpu_custom_call.1} parent=43 // pred_region
          %p340 = scmp.lt.s32.totalorder %s20, 1
          %s341 = scalar_select %p340, %s20, 1
          %s342 = smul.addr %s341, 2
          %s343 = scalar_lea.vmem %s0, %s342
        $region48: #{tpu_custom_call.1} parent=43 // pred_fallthru
          _
        // Predicated region
        $region49: #{tpu_custom_call.1} parent=43 // pred_check
          %p344 = pneg %p66
        $region50: #{tpu_custom_call.1} parent=43 // pred_check_branch
          %346 = sbr.rel (%p344) target = $region52
        $region51: #{tpu_custom_call.1} parent=43 // pred_region
          %p347 = scmp.lt.s32.totalorder %s20, 1
          %s348 = scalar_select %p347, %s20, 1
          %s349 = smul.addr %s348, 2
          %s350 = scalar_lea.vmem %s1, %s349
        $region52: #{tpu_custom_call.1} parent=43 // pred_fallthru
          _
        // Predicated region
        $region53: #{tpu_custom_call.1} parent=43 // pred_check
          %p351 = pneg %p92
        $region54: #{tpu_custom_call.1} parent=43 // pred_check_branch
          %353 = sbr.rel (%p351) target = $region56
        $region55: #{tpu_custom_call.1} parent=43 // pred_region
          %p354 = scmp.lt.s32.totalorder %s20, 1
          %s355 = scalar_select %p354, %s20, 1
          %s356 = smul.addr %s355, 2
          %s357 = scalar_lea.vmem %s2, %s356
        $region56: #{tpu_custom_call.1} parent=43 // pred_fallthru
          _
        // Predicated region
        $region57: #{tpu_custom_call.1} parent=43 // pred_check
          %p358 = pneg %p118
        $region58: #{tpu_custom_call.1} parent=43 // pred_check_branch
          %360 = sbr.rel (%p358) target = $region60
        $region59: #{tpu_custom_call.1} parent=43 // pred_region
          %p361 = scmp.lt.s32.totalorder %s20, 1
          %s362 = scalar_select %p361, %s20, 1
          %s363 = smul.addr %s362, 2
          %s364 = scalar_lea.vmem %s3, %s363
        $region60: #{tpu_custom_call.1} parent=43 // pred_fallthru
          _
      $region44: #{tpu_custom_call.1} parent=5 // pred_fallthru
        _
      %p365 = scmp.le.s32.totalorder 1, %s20
      %p366 = scmp.lt.s32.totalorder %s20, 3
      %p367 = pnand %p365, %p366
      %p368 = pneg %p367
      // Predicated region
      $region61: #{tpu_custom_call.1} parent=5 // pred_check
        _
      $region62: #{tpu_custom_call.1} parent=5 // pred_check_branch
        %370 = sbr.rel (%p367) target = $region64
      $region63: #{tpu_custom_call.1} parent=5 // pred_region
        %s371 = ssub.s32 %s20, 1
        %p372 = scmp.lt.s32.totalorder %s25, 1
        %s373 = scalar_select %p372, %s25, 1
        %s374 = smul.addr %s373, 2
        %s375 = scalar_lea.vmem %s0, %s374
        %p376 = pneg %p46
        %p377 = pneg %p43
        %p378 = scmp.lt.s32.totalorder %s25, 1
        %s379 = scalar_select %p378, %s25, 1
        %s380 = smul.addr %s379, 2
        %s381 = scalar_lea.vmem %s1, %s380
        %p382 = pneg %p72
        %p383 = pneg %p69
        %p384 = scmp.lt.s32.totalorder %s25, 1
        %s385 = scalar_select %p384, %s25, 1
        %s386 = smul.addr %s385, 2
        %s387 = scalar_lea.vmem %s2, %s386
        %p388 = pneg %p98
        %p389 = pneg %p95
        %p390 = scmp.lt.s32.totalorder %s25, 1
        %s391 = scalar_select %p390, %s25, 1
        %s392 = smul.addr %s391, 2
        %s393 = scalar_lea.vmem %s3, %s392
        %p394 = pneg %p124
        %p395 = pneg %p121
        %p396 = pneg %p145
        %p397 = pneg %p142
        %p398 = pneg %p166
        %p399 = pneg %p163
        %p400 = pneg %p187
        %p401 = pneg %p184
        %p402 = pneg %p208
        %p403 = pneg %p205
        %p404 = pneg %p229
        %p405 = pneg %p226
        %p406 = pneg %p250
        %p407 = pneg %p247
        %p408 = pneg %p271
        %p409 = pneg %p268
        %p410 = pneg %p297
        %p411 = pneg %p294
        %s412 = sand.u32 %s284, 1
        %s413 = scalar_lea.sflag [#allocation4], %s412
        %s414 = sand.u32 %s284, 1
        %s415 = smul.addr %s414, 8
        %s416 = scalar_lea.vmem [#allocation3], %s415
        %p417 = scmp.lt.s32.totalorder %s25, 1
        %s418 = scalar_select %p417, %s25, 1
        %s419 = smul.addr %s418, 2
        %s420 = scalar_lea.vmem %s0, %s419
        %p421 = scmp.lt.s32.totalorder %s25, 1
        %s422 = scalar_select %p421, %s25, 1
        %s423 = smul.addr %s422, 2
        %s424 = scalar_lea.vmem %s1, %s423
        %p425 = scmp.lt.s32.totalorder %s25, 1
        %s426 = scalar_select %p425, %s25, 1
        %s427 = smul.addr %s426, 2
        %s428 = scalar_lea.vmem %s2, %s427
        %p429 = scmp.lt.s32.totalorder %s25, 1
        %s430 = scalar_select %p429, %s25, 1
        %s431 = smul.addr %s430, 2
        %s432 = scalar_lea.vmem %s3, %s431
        %v434 = vld [vmem:[%s420] sm:$0x3]
        %v435 = vld [vmem:[%s5] sm:$0xf]
        %v436 = vld [vmem:[%s424] sm:$0x3]
        %s437 = scalar_lea.vmem %s5, 4
        %v438 = vld [vmem:[%s437] sm:$0xf]
        %vm439 = vcmask 31744
        %v441 = vsel %vm439, %v438, 0
        %vm443 = vcmask 1041408
        %v445 = vsel %vm443, %v436, 0
        %447 = vmatpush.bf16.msra.mxu0 0
        %448 = vmatpush.bf16.msra.mxu0 0
        %449 = vmatpush.bf16.msra.mxu0 0
        %450 = vmatpush.bf16.msra.mxu0 0
        %451 = vmatpush.bf16.msra.mxu0 0
        %452 = vmatpush.bf16.msra.mxu0 0
        %453 = vmatpush.bf16.msra.mxu0 0
        %454 = vmatpush.bf16.msra.mxu0 %v445
        %455 = vmatmul.bf16.gmra.mxu0 %v441
        %v456 = vpop.f32.mrf.mxu0
        %v457 = vadd.f32 0.0, %v456
        %v458 = vpop.f32.mrf.mxu0
        %459 = vdwg.mxu0
        %v461 = vsel %vm439, %v435, 0
        %v464 = vsel %vm443, %v434, 0
        %466 = vmatpush.bf16.msra.mxu0 0
        %467 = vmatpush.bf16.msra.mxu0 0
        %468 = vmatpush.bf16.msra.mxu0 0
        %469 = vmatpush.bf16.msra.mxu0 0
        %470 = vmatpush.bf16.msra.mxu0 0
        %471 = vmatpush.bf16.msra.mxu0 0
        %472 = vmatpush.bf16.msra.mxu0 0
        %473 = vmatpush.bf16.msra.mxu0 %v464
        %474 = vmatmul.bf16.gmra.mxu0 %v461
        %v475 = vpop.f32.mrf.mxu0
        %v476 = vadd.f32 %v457, %v475
        %v477 = vpop.f32.mrf.mxu0
        %478 = vdwg.mxu0
        %s479 = scalar_lea.vmem %s5, 8
        %v480 = vld [vmem:[%s479] sm:$0xf]
        %481 = vst [vmem:[#allocation1] ss:$4 sm:$0xff] %v434
        %v482 = vld.sshfl [vmem:[#allocation1] sm:$0xff pattern:$0x73625140]
        %484 = vrot.lane.b32.xlu0 %v482, 127
        %v485 = vpop.permute.xlu0 %484
        %v487 = vsel %vm439, %v480, 0
        %v490 = vsel %vm443, %v485, 0
        %492 = vmatpush.bf16.msra.mxu0 0
        %493 = vmatpush.bf16.msra.mxu0 0
        %494 = vmatpush.bf16.msra.mxu0 0
        %495 = vmatpush.bf16.msra.mxu0 0
        %496 = vmatpush.bf16.msra.mxu0 0
        %497 = vmatpush.bf16.msra.mxu0 0
        %498 = vmatpush.bf16.msra.mxu0 0
        %499 = vmatpush.bf16.msra.mxu0 %v490
        %500 = vmatmul.bf16.gmra.mxu0 %v487
        %v501 = vpop.f32.mrf.mxu0
        %v502 = vadd.f32 0.0, %v501
        %v503 = vpop.f32.mrf.mxu0
        %504 = vdwg.mxu0
        %v505 = vadd.f32 %v476, %v502
        %v506 = vld [vmem:[%s428] sm:$0x3]
        %s507 = scalar_lea.vmem %s5, 12
        %v508 = vld [vmem:[%s507] sm:$0xf]
        %v510 = vsel %vm439, %v508, 0
        %v513 = vsel %vm443, %v506, 0
        %515 = vmatpush.bf16.msra.mxu0 0
        %516 = vmatpush.bf16.msra.mxu0 0
        %517 = vmatpush.bf16.msra.mxu0 0
        %518 = vmatpush.bf16.msra.mxu0 0
        %519 = vmatpush.bf16.msra.mxu0 0
        %520 = vmatpush.bf16.msra.mxu0 0
        %521 = vmatpush.bf16.msra.mxu0 0
        %522 = vmatpush.bf16.msra.mxu0 %v513
        %523 = vmatmul.bf16.gmra.mxu0 %v510
        %v524 = vpop.f32.mrf.mxu0
        %v525 = vadd.f32 0.0, %v524
        %v526 = vpop.f32.mrf.mxu0
        %527 = vdwg.mxu0
        %v528 = vadd.f32 %v505, %v525
        %v529 = vld [vmem:[%s432] sm:$0x3]
        %s530 = scalar_lea.vmem %s5, 16
        %v531 = vld [vmem:[%s530] sm:$0xf]
        %v533 = vsel %vm439, %v531, 0
        %v536 = vsel %vm443, %v529, 0
        %538 = vmatpush.bf16.msra.mxu0 0
        %539 = vmatpush.bf16.msra.mxu0 0
        %540 = vmatpush.bf16.msra.mxu0 0
        %541 = vmatpush.bf16.msra.mxu0 0
        %542 = vmatpush.bf16.msra.mxu0 0
        %543 = vmatpush.bf16.msra.mxu0 0
        %544 = vmatpush.bf16.msra.mxu0 0
        %545 = vmatpush.bf16.msra.mxu0 %v536
        %546 = vmatmul.bf16.gmra.mxu0 %v533
        %v547 = vpop.f32.mrf.mxu0
        %v548 = vadd.f32 0.0, %v547
        %v549 = vpop.f32.mrf.mxu0
        %550 = vdwg.mxu0
        %v551 = vadd.f32 %v528, %v548
        %s552 = scalar_lea.vmem %s5, 20
        %v553 = vld [vmem:[%s552] sm:$0xf]
        %554 = vst [vmem:[#allocation1] ss:$4 sm:$0xff] %v506
        %v555 = vld.sshfl [vmem:[#allocation1] sm:$0xff pattern:$0x73625140]
        %557 = vrot.lane.b32.xlu0 %v555, 127
        %v558 = vpop.permute.xlu0 %557
        %v560 = vsel %vm439, %v553, 0
        %v563 = vsel %vm443, %v558, 0
        %565 = vmatpush.bf16.msra.mxu0 0
        %566 = vmatpush.bf16.msra.mxu0 0
        %567 = vmatpush.bf16.msra.mxu0 0
        %568 = vmatpush.bf16.msra.mxu0 0
        %569 = vmatpush.bf16.msra.mxu0 0
        %570 = vmatpush.bf16.msra.mxu0 0
        %571 = vmatpush.bf16.msra.mxu0 0
        %572 = vmatpush.bf16.msra.mxu0 %v563
        %573 = vmatmul.bf16.gmra.mxu0 %v560
        %v574 = vpop.f32.mrf.mxu0
        %v575 = vadd.f32 0.0, %v574
        %v576 = vpop.f32.mrf.mxu0
        %577 = vdwg.mxu0
        %v578 = vadd.f32 %v551, %v575
        %v579 = vld [vmem:[%s420] sm:$0x3]
        %s580 = scalar_lea.vmem %s5, 24
        %v581 = vld [vmem:[%s580] sm:$0xf]
        %583 = vst [vmem:[#allocation1] ss:$4 sm:$0xff] %v579
        %v584 = vld.sshfl [vmem:[#allocation1] sm:$0xff pattern:$0x73625140]
        %586 = vrot.lane.b32.xlu0 %v584, 118
        %v587 = vpop.permute.xlu0 %586
        %v589 = vsel %vm439, %v581, 0
        %v592 = vsel %vm443, %v587, 0
        %594 = vmatpush.bf16.msra.mxu0 0
        %595 = vmatpush.bf16.msra.mxu0 0
        %596 = vmatpush.bf16.msra.mxu0 0
        %597 = vmatpush.bf16.msra.mxu0 0
        %598 = vmatpush.bf16.msra.mxu0 0
        %599 = vmatpush.bf16.msra.mxu0 0
        %600 = vmatpush.bf16.msra.mxu0 0
        %601 = vmatpush.bf16.msra.mxu0 %v592
        %602 = vmatmul.bf16.gmra.mxu0 %v589
        %v603 = vpop.f32.mrf.mxu0
        %v604 = vadd.f32 0.0, %v603
        %v605 = vpop.f32.mrf.mxu0
        %606 = vdwg.mxu0
        %v607 = vadd.f32 %v578, %v604
        %v608 = vld [vmem:[%s424] sm:$0x3]
        %s609 = scalar_lea.vmem %s5, 28
        %v610 = vld [vmem:[%s609] sm:$0xf]
        %612 = vst [vmem:[#allocation1] ss:$4 sm:$0xff] %v608
        %v613 = vld.sshfl [vmem:[#allocation1] sm:$0xff pattern:$0x73625140]
        %615 = vrot.lane.b32.xlu0 %v613, 118
        %v616 = vpop.permute.xlu0 %615
        %v618 = vsel %vm439, %v610, 0
        %v621 = vsel %vm443, %v616, 0
        %623 = vmatpush.bf16.msra.mxu0 0
        %624 = vmatpush.bf16.msra.mxu0 0
        %625 = vmatpush.bf16.msra.mxu0 0
        %626 = vmatpush.bf16.msra.mxu0 0
        %627 = vmatpush.bf16.msra.mxu0 0
        %628 = vmatpush.bf16.msra.mxu0 0
        %629 = vmatpush.bf16.msra.mxu0 0
        %630 = vmatpush.bf16.msra.mxu0 %v621
        %631 = vmatmul.bf16.gmra.mxu0 %v618
        %v632 = vpop.f32.mrf.mxu0
        %v633 = vadd.f32 0.0, %v632
        %v634 = vpop.f32.mrf.mxu0
        %635 = vdwg.mxu0
        %v636 = vadd.f32 %v607, %v633
        %v637 = vld [vmem:[%s420] sm:$0x3]
        %s638 = scalar_lea.vmem %s5, 32
        %v639 = vld [vmem:[%s638] sm:$0xf]
        %641 = vst [vmem:[#allocation1] ss:$4 sm:$0xff] %v637
        %v642 = vld.sshfl [vmem:[#allocation1] sm:$0xff pattern:$0x73625140]
        %644 = vrot.lane.b32.xlu0 %v642, 117
        %v645 = vpop.permute.xlu0 %644
        %v647 = vsel %vm439, %v639, 0
        %v650 = vsel %vm443, %v645, 0
        %652 = vmatpush.bf16.msra.mxu0 0
        %653 = vmatpush.bf16.msra.mxu0 0
        %654 = vmatpush.bf16.msra.mxu0 0
        %655 = vmatpush.bf16.msra.mxu0 0
        %656 = vmatpush.bf16.msra.mxu0 0
        %657 = vmatpush.bf16.msra.mxu0 0
        %658 = vmatpush.bf16.msra.mxu0 0
        %659 = vmatpush.bf16.msra.mxu0 %v650
        %660 = vmatmul.bf16.gmra.mxu0 %v647
        %v661 = vpop.f32.mrf.mxu0
        %v662 = vadd.f32 0.0, %v661
        %v663 = vpop.f32.mrf.mxu0
        %664 = vdwg.mxu0
        %v665 = vadd.f32 %v636, %v662
        %v666 = vld [vmem:[%s6] sm:$0xff]
        %668 = vset.pattern.permute.xlu0 0
        %669 = vperm.xlu0 %668, %v666
        %v670 = vpop.permute.xlu0 %669
        %v672 = vadd.f32 %v665, %v670
        %v673 = vmax.f32 %v672, 0.0
        %v674 = vld [vmem:[%s4] sm:$0x1]
        %v676 = vperm.slane %v674, 0
        %v678 = vmul.f32 %v673, %v676
        %679 = vst [vmem:[#allocation2] sm:$0xf] 0
        %vm680 = vcmask 1044256
        %681 = vst.msk [vmem:[#allocation2 + $0x4] sm:$0xf] %vm680, 0
        %v682 = vpack.c.bf16 %v678, %v678
        %vm683 = vcmask 814080
        %684 = vst.msk [vmem:[#allocation2 + $0x4] sm:$0xf] %vm683, %v682
        %v685 = vld [vmem:[#allocation2] sm:$0xff]
        %v686 = vld [vmem:[%s7] sm:$0xf]
        %s687 = scalar_lea.vmem %s7, 4
        %v688 = vld [vmem:[%s687] sm:$0xf]
        %v690 = vunpack.c.l.b16 %v685
        %v691 = vunpack.c.h.b16 %v685
        %v692 = vpack.c.b16 %v690, %v690
        %v693 = vpack.c.b16 %v691, %v691
        %694 = vrot.lane.b32.xlu0 %v692, 10
        %v695 = vpop.permute.xlu0 %694
        %696 = vrot.lane.b32.xlu0 %v693, 10
        %v697 = vpop.permute.xlu0 %696
        %vm698 = vcmask 80896
        %v699 = vsel %vm698, %v695, %v697
        %vm700 = vcmask 64512
        %v702 = vsel %vm700, %v688, 0
        %vm704 = vcmask 1043456
        %v706 = vsel %vm704, %v699, 0
        %708 = vmatpush.bf16.msra.mxu0 0
        %709 = vmatpush.bf16.msra.mxu0 0
        %710 = vmatpush.bf16.msra.mxu0 0
        %711 = vmatpush.bf16.msra.mxu0 0
        %712 = vmatpush.bf16.msra.mxu0 0
        %713 = vmatpush.bf16.msra.mxu0 0
        %714 = vmatpush.bf16.msra.mxu0 0
        %715 = vmatpush.bf16.msra.mxu0 %v706
        %716 = vmatmul.bf16.gmra.mxu0 %v702
        %v717 = vpop.f32.mrf.mxu0
        %v718 = vadd.f32 0.0, %v717
        %v719 = vpop.f32.mrf.mxu0
        %720 = vdwg.mxu0
        %721 = vrot.lane.b32.xlu0 %v692, 11
        %v722 = vpop.permute.xlu0 %721
        %723 = vrot.lane.b32.xlu0 %v693, 11
        %v724 = vpop.permute.xlu0 %723
        %vm725 = vcmask 89088
        %v726 = vsel %vm725, %v722, %v724
        %v728 = vsel %vm700, %v686, 0
        %v731 = vsel %vm704, %v726, 0
        %733 = vmatpush.bf16.msra.mxu0 0
        %734 = vmatpush.bf16.msra.mxu0 0
        %735 = vmatpush.bf16.msra.mxu0 0
        %736 = vmatpush.bf16.msra.mxu0 0
        %737 = vmatpush.bf16.msra.mxu0 0
        %738 = vmatpush.bf16.msra.mxu0 0
        %739 = vmatpush.bf16.msra.mxu0 0
        %740 = vmatpush.bf16.msra.mxu0 %v731
        %741 = vmatmul.bf16.gmra.mxu0 %v728
        %v742 = vpop.f32.mrf.mxu0
        %v743 = vadd.f32 %v718, %v742
        %v744 = vpop.f32.mrf.mxu0
        %745 = vdwg.mxu0
        %s746 = scalar_lea.vmem %s7, 8
        %v747 = vld [vmem:[%s746] sm:$0xf]
        %748 = vrot.lane.b32.xlu0 %v692, 9
        %v749 = vpop.permute.xlu0 %748
        %750 = vrot.lane.b32.xlu0 %v693, 9
        %v751 = vpop.permute.xlu0 %750
        %vm752 = vcmask 72704
        %v753 = vsel %vm752, %v749, %v751
        %v755 = vsel %vm700, %v747, 0
        %v758 = vsel %vm704, %v753, 0
        %760 = vmatpush.bf16.msra.mxu0 0
        %761 = vmatpush.bf16.msra.mxu0 0
        %762 = vmatpush.bf16.msra.mxu0 0
        %763 = vmatpush.bf16.msra.mxu0 0
        %764 = vmatpush.bf16.msra.mxu0 0
        %765 = vmatpush.bf16.msra.mxu0 0
        %766 = vmatpush.bf16.msra.mxu0 0
        %767 = vmatpush.bf16.msra.mxu0 %v758
        %768 = vmatmul.bf16.gmra.mxu0 %v755
        %v769 = vpop.f32.mrf.mxu0
        %v770 = vadd.f32 0.0, %v769
        %v771 = vpop.f32.mrf.mxu0
        %772 = vdwg.mxu0
        %v773 = vadd.f32 %v743, %v770
        %s774 = scalar_lea.vmem %s7, 12
        %v775 = vld [vmem:[%s774] sm:$0xf]
        %776 = vrot.lane.b32.xlu0 %v692, 1
        %v777 = vpop.permute.xlu0 %776
        %778 = vrot.lane.b32.xlu0 %v693, 1
        %v779 = vpop.permute.xlu0 %778
        %vm780 = vcmask 7168
        %v781 = vsel %vm780, %v777, %v779
        %v783 = vsel %vm700, %v775, 0
        %v786 = vsel %vm704, %v781, 0
        %788 = vmatpush.bf16.msra.mxu0 0
        %789 = vmatpush.bf16.msra.mxu0 0
        %790 = vmatpush.bf16.msra.mxu0 0
        %791 = vmatpush.bf16.msra.mxu0 0
        %792 = vmatpush.bf16.msra.mxu0 0
        %793 = vmatpush.bf16.msra.mxu0 0
        %794 = vmatpush.bf16.msra.mxu0 0
        %795 = vmatpush.bf16.msra.mxu0 %v786
        %796 = vmatmul.bf16.gmra.mxu0 %v783
        %v797 = vpop.f32.mrf.mxu0
        %v798 = vadd.f32 0.0, %v797
        %v799 = vpop.f32.mrf.mxu0
        %800 = vdwg.mxu0
        %v801 = vadd.f32 %v773, %v798
        %v802 = vld [vmem:[#allocation2 + $0x4] sm:$0xf]
        %s803 = scalar_lea.vmem %s7, 16
        %v804 = vld [vmem:[%s803] sm:$0xf]
        %v806 = vsel %vm700, %v804, 0
        %v809 = vsel %vm704, %v802, 0
        %811 = vmatpush.bf16.msra.mxu0 0
        %812 = vmatpush.bf16.msra.mxu0 0
        %813 = vmatpush.bf16.msra.mxu0 0
        %814 = vmatpush.bf16.msra.mxu0 0
        %815 = vmatpush.bf16.msra.mxu0 0
        %816 = vmatpush.bf16.msra.mxu0 0
        %817 = vmatpush.bf16.msra.mxu0 0
        %818 = vmatpush.bf16.msra.mxu0 %v809
        %819 = vmatmul.bf16.gmra.mxu0 %v806
        %v820 = vpop.f32.mrf.mxu0
        %v821 = vadd.f32 0.0, %v820
        %v822 = vpop.f32.mrf.mxu0
        %823 = vdwg.mxu0
        %v824 = vadd.f32 %v801, %v821
        %s825 = scalar_lea.vmem %s7, 20
        %v826 = vld [vmem:[%s825] sm:$0xf]
        %v828 = vunpack.c.l.b16 %v802
        %v829 = vpack.c.b16 %v828, %v828
        %830 = vrot.lane.b32.xlu0 %v829, 127
        %v831 = vpop.permute.xlu0 %830
        %v833 = vsel %vm700, %v826, 0
        %v836 = vsel %vm704, %v831, 0
        %838 = vmatpush.bf16.msra.mxu0 0
        %839 = vmatpush.bf16.msra.mxu0 0
        %840 = vmatpush.bf16.msra.mxu0 0
        %841 = vmatpush.bf16.msra.mxu0 0
        %842 = vmatpush.bf16.msra.mxu0 0
        %843 = vmatpush.bf16.msra.mxu0 0
        %844 = vmatpush.bf16.msra.mxu0 0
        %845 = vmatpush.bf16.msra.mxu0 %v836
        %846 = vmatmul.bf16.gmra.mxu0 %v833
        %v847 = vpop.f32.mrf.mxu0
        %v848 = vadd.f32 0.0, %v847
        %v849 = vpop.f32.mrf.mxu0
        %850 = vdwg.mxu0
        %v851 = vadd.f32 %v824, %v848
        %s852 = scalar_lea.vmem %s7, 24
        %v853 = vld [vmem:[%s852] sm:$0xf]
        %854 = vrot.lane.b32.xlu0 %v829, 119
        %v855 = vpop.permute.xlu0 %854
        %v857 = vsel %vm700, %v853, 0
        %v860 = vsel %vm704, %v855, 0
        %862 = vmatpush.bf16.msra.mxu0 0
        %863 = vmatpush.bf16.msra.mxu0 0
        %864 = vmatpush.bf16.msra.mxu0 0
        %865 = vmatpush.bf16.msra.mxu0 0
        %866 = vmatpush.bf16.msra.mxu0 0
        %867 = vmatpush.bf16.msra.mxu0 0
        %868 = vmatpush.bf16.msra.mxu0 0
        %869 = vmatpush.bf16.msra.mxu0 %v860
        %870 = vmatmul.bf16.gmra.mxu0 %v857
        %v871 = vpop.f32.mrf.mxu0
        %v872 = vadd.f32 0.0, %v871
        %v873 = vpop.f32.mrf.mxu0
        %874 = vdwg.mxu0
        %v875 = vadd.f32 %v851, %v872
        %s876 = scalar_lea.vmem %s7, 28
        %v877 = vld [vmem:[%s876] sm:$0xf]
        %878 = vrot.lane.b32.xlu0 %v829, 118
        %v879 = vpop.permute.xlu0 %878
        %v881 = vsel %vm700, %v877, 0
        %v884 = vsel %vm704, %v879, 0
        %886 = vmatpush.bf16.msra.mxu0 0
        %887 = vmatpush.bf16.msra.mxu0 0
        %888 = vmatpush.bf16.msra.mxu0 0
        %889 = vmatpush.bf16.msra.mxu0 0
        %890 = vmatpush.bf16.msra.mxu0 0
        %891 = vmatpush.bf16.msra.mxu0 0
        %892 = vmatpush.bf16.msra.mxu0 0
        %893 = vmatpush.bf16.msra.mxu0 %v884
        %894 = vmatmul.bf16.gmra.mxu0 %v881
        %v895 = vpop.f32.mrf.mxu0
        %v896 = vadd.f32 0.0, %v895
        %v897 = vpop.f32.mrf.mxu0
        %898 = vdwg.mxu0
        %v899 = vadd.f32 %v875, %v896
        %s900 = scalar_lea.vmem %s7, 32
        %v901 = vld [vmem:[%s900] sm:$0xf]
        %902 = vrot.lane.b32.xlu0 %v829, 117
        %v903 = vpop.permute.xlu0 %902
        %v905 = vsel %vm700, %v901, 0
        %v908 = vsel %vm704, %v903, 0
        %910 = vmatpush.bf16.msra.mxu0 0
        %911 = vmatpush.bf16.msra.mxu0 0
        %912 = vmatpush.bf16.msra.mxu0 0
        %913 = vmatpush.bf16.msra.mxu0 0
        %914 = vmatpush.bf16.msra.mxu0 0
        %915 = vmatpush.bf16.msra.mxu0 0
        %916 = vmatpush.bf16.msra.mxu0 0
        %917 = vmatpush.bf16.msra.mxu0 %v908
        %918 = vmatmul.bf16.gmra.mxu0 %v905
        %v919 = vpop.f32.mrf.mxu0
        %v920 = vadd.f32 0.0, %v919
        %v921 = vpop.f32.mrf.mxu0
        %922 = vdwg.mxu0
        %v923 = vadd.f32 %v899, %v920
        %v924 = vld [vmem:[%s8] sm:$0xff]
        %926 = vset.pattern.permute.xlu0 0
        %927 = vperm.xlu0 %926, %v924
        %v928 = vpop.permute.xlu0 %927
        %v930 = vadd.f32 %v923, %v928
        %v931 = vld [vmem:[%s432] sm:$0x3]
        %v932 = vld [vmem:[%s9] sm:$0xf]
        %v933 = vld [vmem:[%s10] sm:$0xff]
        %935 = vset.pattern.permute.xlu0 0
        %936 = vperm.xlu0 %935, %v933
        %v937 = vpop.permute.xlu0 %936
        %v940 = vsel %vm439, %v932, 0
        %v943 = vsel %vm443, %v931, 0
        %945 = vmatpush.bf16.msra.mxu0 0
        %946 = vmatpush.bf16.msra.mxu0 0
        %947 = vmatpush.bf16.msra.mxu0 0
        %948 = vmatpush.bf16.msra.mxu0 0
        %949 = vmatpush.bf16.msra.mxu0 0
        %950 = vmatpush.bf16.msra.mxu0 0
        %951 = vmatpush.bf16.msra.mxu0 0
        %952 = vmatpush.bf16.msra.mxu0 %v943
        %953 = vmatmul.bf16.gmra.mxu0 %v940
        %v954 = vpop.f32.mrf.mxu0
        %v955 = vadd.f32 %v937, %v954
        %v956 = vpop.f32.mrf.mxu0
        %957 = vdwg.mxu0
        %v958 = vadd.f32 %v930, %v955
        %v959 = vmax.f32 %v958, 0.0
        %vm960 = vcmask 818176
        %961 = vst.msk [vmem:[%s416] sm:$0xff] %vm960, %v959
        %s962 = sand.u32 %s284, 1
        %s963 = scalar_lea.sflag [#allocation4], %s962
        %s964 = sand.u32 %s284, 1
        %s965 = smul.addr %s964, 8
        %s966 = scalar_lea.vmem [#allocation3], %s965
        // Predicated region
        $region65: #{tpu_custom_call.1} parent=63 // pred_check
          %p967 = pneg %p294
        $region66: #{tpu_custom_call.1} parent=63 // pred_check_branch
          %969 = sbr.rel (%p967) target = $region68
        $region67: #{tpu_custom_call.1} parent=63 // pred_region
          %971 = vsyncadd %s963, 0
          %s972 = smul.addr %s25, 8
          %s973 = scalar_lea.hbm %s11, %s972
          %s975 = sshll.u32 %s966, 4
          %s976 = int_to_ptr.vmem [resolvable:$true] %s975
          %s977 = sshll.u32 %s973, 4
          %s978 = int_to_ptr.hbm [resolvable:$true] %s977
          %980 = dma.vmem_to_hbm [thread:$0]  %s976, 128, %s978, %s963
        $region68: #{tpu_custom_call.1} parent=63 // pred_fallthru
          _
      $region64: #{tpu_custom_call.1} parent=5 // pred_fallthru
        _
      %p981 = scmp.le.s32.totalorder 2, %s20
      // Predicated region
      $region69: #{tpu_custom_call.1} parent=5 // pred_check
        %p982 = pneg %p981
      $region70: #{tpu_custom_call.1} parent=5 // pred_check_branch
        %984 = sbr.rel (%p982) target = $region72
      $region71: #{tpu_custom_call.1} parent=5 // pred_region
        %s985 = ssub.s32 %s20, 2
        // Predicated region
        $region73: #{tpu_custom_call.1} parent=71 // pred_check
          %p986 = pneg %p300
        $region74: #{tpu_custom_call.1} parent=71 // pred_check_branch
          %988 = sbr.rel (%p986) target = $region76
        $region75: #{tpu_custom_call.1} parent=71 // pred_region
          %s989 = sand.u32 %s285, 1
          %s990 = scalar_lea.sflag [#allocation4], %s989
          %s991 = sand.u32 %s285, 1
          %s992 = smul.addr %s991, 8
          %s993 = scalar_lea.vmem [#allocation3], %s992
          %995 = dma.done %s990, 128
        $region76: #{tpu_custom_call.1} parent=71 // pred_fallthru
          _
      $region72: #{tpu_custom_call.1} parent=5 // pred_fallthru
        _
    $region6: #{tpu_custom_call.1} parent=1 // loop_footer
      %s24 = sadd.s32 1, %s20
    $region7: #{tpu_custom_call.1} parent=1 // loop_footer_branch
      %19 = sbr.rel target = $region3
    $region8: #{tpu_custom_call.1} parent=1 // loop_exit
      _
    %996 = vsyncpa [#allocation4], 1
    %s997 = scalar_lea.sflag [#allocation4], 1
    %998 = vsyncpa %s997, 1

</llo_original>
